<compile_context>
chip_gen: v7x
topology: tpu7x:2x2x1
jax: 0.10.0
libtpu: 0.0.40
codegen_flags: <defaults>
</compile_context>

<pallas_src>
import jax
import jax.numpy as jnp
from jax.experimental import pallas as pl
from jax.experimental.pallas import tpu as pltpu


def _round_up(n, m):
    return ((n + m - 1) // m) * m


def _vae_kernel(x_ref, eps_ref,
                w1_ref, b1_ref,
                wh_ref, bh_ref,
                w2_ref, b2_ref,
                w3_ref, b3_ref,
                xr_ref, mu_ref, sigma_ref):
    """One batch tile of the whole VAE forward (5 matmuls fused in-body)."""
    zp = mu_ref.shape[-1]               # lane-padded latent width (multiple of 128)
    bf16 = jnp.bfloat16

    # ---- encode: h = relu(x @ W1 + b1)  (bf16 MXU, f32 accumulate) ----
    x = x_ref[...].astype(bf16)
    h = jnp.dot(x, w1_ref[...], preferred_element_type=jnp.float32) + b1_ref[...]
    h = jnp.maximum(h, 0.0)

    # ---- fused mu/sigma head: single (h_dim, 2*zp) matmul, lane-aligned halves ----
    head = jnp.dot(h.astype(bf16), wh_ref[...],
                   preferred_element_type=jnp.float32) + bh_ref[...]
    mu = head[:, :zp]
    sigma = head[:, zp:]

    # ---- reparameterize: z = mu + sigma * eps  (f32 elementwise) ----
    z = mu + sigma * eps_ref[...]

    # ---- decode: x_rec = sigmoid(relu(z @ W2 + b2) @ W3 + b3) ----
    h2 = jnp.dot(z.astype(bf16), w2_ref[...],
                 preferred_element_type=jnp.float32) + b2_ref[...]
    h2 = jnp.maximum(h2, 0.0)
    logits = jnp.dot(h2.astype(bf16), w3_ref[...],
                     preferred_element_type=jnp.float32) + b3_ref[...]
    # exp -> EUP, approx reciprocal -> EUP vrcp: keeps the epilogue off the VALU.
    xr_ref[...] = pl.reciprocal(1.0 + jnp.exp(-logits), approx=True)

    mu_ref[...] = mu
    sigma_ref[...] = sigma


def vae_forward(x, eps, params, *, tb=256):
    """x: (B, input_dim) f32, eps: (B, z_dim) f32, params: dict of f32 weights/biases.

    Returns (x_reconstructed, mu, sigma) with PyTorch-module semantics.
    """
    B, input_dim = x.shape
    z_dim = eps.shape[1]
    h_dim = params["w1"].shape[1]

    f32, bf16 = jnp.float32, jnp.bfloat16

    # Batch tile: MXU-shaped but never bigger than the (8-aligned) batch.
    tb = min(tb, _round_up(B, 8))
    b_pad = _round_up(B, tb)
    zp = _round_up(z_dim, 128)          # lane-padded latent width

    # ---- pack / fuse / pad weights (cheap one-off XLA ops in the wrapper) ----
    w1 = params["w1"].astype(bf16)
    b1 = params["b1"].reshape(1, h_dim).astype(f32)

    w_head = jnp.zeros((h_dim, 2 * zp), bf16)
    w_head = w_head.at[:, :z_dim].set(params["w_mu"].astype(bf16))
    w_head = w_head.at[:, zp:zp + z_dim].set(params["w_sigma"].astype(bf16))
    b_head = jnp.zeros((1, 2 * zp), f32)
    b_head = b_head.at[:, :z_dim].set(params["b_mu"].reshape(1, z_dim))
    b_head = b_head.at[:, zp:zp + z_dim].set(params["b_sigma"].reshape(1, z_dim))

    w2 = jnp.zeros((zp, h_dim), bf16).at[:z_dim, :].set(params["w2"].astype(bf16))
    b2 = params["b2"].reshape(1, h_dim).astype(f32)
    w3 = params["w3"].astype(bf16)
    b3 = params["b3"].reshape(1, input_dim).astype(f32)

    # ---- pad activations (batch to tile multiple, latent to 128 lanes) ----
    xp = jnp.zeros((b_pad, input_dim), f32).at[:B].set(x.astype(f32))
    ep = jnp.zeros((b_pad, zp), f32).at[:B, :z_dim].set(eps.astype(f32))

    tiled = lambda i: (i, 0)        # batch-tiled streams
    resident = lambda i: (0, 0)     # weights/biases: same block every step -> stay in VMEM

    flops = 2 * b_pad * (input_dim * h_dim + h_dim * 2 * zp
                         + zp * h_dim + h_dim * input_dim)
    bytes_accessed = (
        xp.size * 4 + ep.size * 4
        + (w1.size + w_head.size + w2.size + w3.size) * 2
        + (b1.size + b_head.size + b2.size + b3.size) * 4
        + (b_pad * input_dim + 2 * b_pad * zp) * 4)

    xr_p, mu_p, sigma_p = pl.pallas_call(
        _vae_kernel,
        out_shape=(
            jax.ShapeDtypeStruct((b_pad, input_dim), f32),   # x_reconstructed
            jax.ShapeDtypeStruct((b_pad, zp), f32),          # mu (lane-padded)
            jax.ShapeDtypeStruct((b_pad, zp), f32),          # sigma (lane-padded)
        ),
        grid=(b_pad // tb,),
        in_specs=[
            pl.BlockSpec((tb, input_dim), tiled),        # x
            pl.BlockSpec((tb, zp), tiled),               # eps (padded)
            pl.BlockSpec((input_dim, h_dim), resident),  # W1
            pl.BlockSpec((1, h_dim), resident),          # b1
            pl.BlockSpec((h_dim, 2 * zp), resident),     # W_head (mu|sigma fused)
            pl.BlockSpec((1, 2 * zp), resident),         # b_head
            pl.BlockSpec((zp, h_dim), resident),         # W2 (zero-padded rows)
            pl.BlockSpec((1, h_dim), resident),          # b2
            pl.BlockSpec((h_dim, input_dim), resident),  # W3
            pl.BlockSpec((1, input_dim), resident),      # b3
        ],
        out_specs=(
            pl.BlockSpec((tb, input_dim), tiled),
            pl.BlockSpec((tb, zp), tiled),
            pl.BlockSpec((tb, zp), tiled),
        ),
        compiler_params=pltpu.CompilerParams(
            dimension_semantics=("parallel",),           # shard batch tiles across TCs (v7x)
        ),
        cost_estimate=pl.CostEstimate(
            flops=flops,
            transcendentals=b_pad * input_dim,
            bytes_accessed=bytes_accessed),
    )(xp, ep, w1, b1, w_head, b_head, w2, b2, w3, b3)

    # Strip batch and lane padding outside the kernel (plain XLA slices).
    return xr_p[:B], mu_p[:B, :z_dim], sigma_p[:B, :z_dim]


def init_params(key, input_dim, h_dim, z_dim):
    """Deterministic synthetic init; weights stored as (in_features, out_features)."""
    ks = jax.random.split(key, 10)

    def lin(kw, kb, fan_in, fan_out):
        bound = 1.0 / jnp.sqrt(fan_in)
        w = jax.random.uniform(kw, (fan_in, fan_out), jnp.float32, -bound, bound)
        b = jax.random.uniform(kb, (fan_out,), jnp.float32, -bound, bound)
        return w, b

    w1, b1 = lin(ks[0], ks[1], input_dim, h_dim)        # image_to_hidden
    w_mu, b_mu = lin(ks[2], ks[3], h_dim, z_dim)        # hidden_to_mu
    w_sigma, b_sigma = lin(ks[4], ks[5], h_dim, z_dim)  # hidden_to_sigma
    w2, b2 = lin(ks[6], ks[7], z_dim, h_dim)            # z_to_hidden
    w3, b3 = lin(ks[8], ks[9], h_dim, input_dim)        # hidden_to_image
    return dict(w1=w1, b1=b1, w_mu=w_mu, b_mu=b_mu,
                w_sigma=w_sigma, b_sigma=b_sigma,
                w2=w2, b2=b2, w3=w3, b3=b3)


def vae_reference(x, eps, p):
    """Pure-JAX reference with the same bf16-matmul / f32-accumulate math."""
    bf16 = jnp.bfloat16

    def mm(a, w):
        return jnp.dot(a.astype(bf16), w.astype(bf16),
                       preferred_element_type=jnp.float32)

    h = jnp.maximum(mm(x, p["w1"]) + p["b1"], 0.0)
    mu = mm(h, p["w_mu"]) + p["b_mu"]
    sigma = mm(h, p["w_sigma"]) + p["b_sigma"]
    z = mu + sigma * eps
    h2 = jnp.maximum(mm(z, p["w2"]) + p["b2"], 0.0)
    xr = jax.nn.sigmoid(mm(h2, p["w3"]) + p["b3"])
    return xr, mu, sigma


if __name__ == "__main__":
    # Small but MXU-friendly shapes (batch tiles of 256, 128-lane-padded z).
    B, INPUT_DIM, H_DIM, Z_DIM = 512, 256, 256, 32

    key = jax.random.PRNGKey(0)
    k_x, k_eps, k_p = jax.random.split(key, 3)

    x = jax.random.uniform(k_x, (B, INPUT_DIM), jnp.float32)   # "image" in [0,1)
    # TODO(synk): epsilon is an explicit input (deterministic); torch.randn_like
    # sampling inside forward could instead use pltpu.prng_random_bits in-kernel.
    eps = jax.random.normal(k_eps, (B, Z_DIM), jnp.float32)
    params = init_params(k_p, INPUT_DIM, H_DIM, Z_DIM)

    xr, mu, sigma = vae_forward(x, eps, params, tb=256)
    jax.block_until_ready((xr, mu, sigma))

    xr_ref, mu_ref, sigma_ref = vae_reference(x, eps, params)
    assert xr.shape == (B, INPUT_DIM) and mu.shape == (B, Z_DIM) and sigma.shape == (B, Z_DIM)
    assert jnp.allclose(xr, xr_ref, rtol=2e-2, atol=2e-2), "x_reconstructed mismatch"
    assert jnp.allclose(mu, mu_ref, rtol=2e-2, atol=2e-2), "mu mismatch"
    assert jnp.allclose(sigma, sigma_ref, rtol=2e-2, atol=2e-2), "sigma mismatch"

    print("KERNEL_OK")
</pallas_src>

<mosaic_0001>
module attributes {stable_mosaic.version = 11 : i64} {
  func.func @_vae_kernel(%arg0: i32, %arg1: memref<256x256xf32, #tpu.memory_space<vmem>>, %arg2: memref<256x128xf32, #tpu.memory_space<vmem>>, %arg3: memref<256x256xbf16, #tpu.memory_space<vmem>>, %arg4: memref<1x256xf32, #tpu.memory_space<vmem>>, %arg5: memref<256x256xbf16, #tpu.memory_space<vmem>>, %arg6: memref<1x256xf32, #tpu.memory_space<vmem>>, %arg7: memref<128x256xbf16, #tpu.memory_space<vmem>>, %arg8: memref<1x256xf32, #tpu.memory_space<vmem>>, %arg9: memref<256x256xbf16, #tpu.memory_space<vmem>>, %arg10: memref<1x256xf32, #tpu.memory_space<vmem>>, %arg11: memref<256x256xf32, #tpu.memory_space<vmem>>, %arg12: memref<256x128xf32, #tpu.memory_space<vmem>>, %arg13: memref<256x128xf32, #tpu.memory_space<vmem>>) attributes {dimension_semantics = [#tpu.dimension_semantics<parallel>], iteration_bounds = array<i64: 2>, scalar_prefetch = 0 : i64, scratch_operands = 0 : i64, tpu.core_type = #tpu.core_type<tc>, window_params = [{transform_indices = @transform_0, window_bounds = array<i64: 256, 256>}, {transform_indices = @transform_1, window_bounds = array<i64: 256, 128>}, {pipeline_mode = #tpu.pipeline_mode<synchronous>, transform_indices = @transform_2, window_bounds = array<i64: 256, 256>}, {pipeline_mode = #tpu.pipeline_mode<synchronous>, transform_indices = @transform_3, window_bounds = array<i64: 1, 256>}, {pipeline_mode = #tpu.pipeline_mode<synchronous>, transform_indices = @transform_4, window_bounds = array<i64: 256, 256>}, {pipeline_mode = #tpu.pipeline_mode<synchronous>, transform_indices = @transform_5, window_bounds = array<i64: 1, 256>}, {pipeline_mode = #tpu.pipeline_mode<synchronous>, transform_indices = @transform_6, window_bounds = array<i64: 128, 256>}, {pipeline_mode = #tpu.pipeline_mode<synchronous>, transform_indices = @transform_7, window_bounds = array<i64: 1, 256>}, {pipeline_mode = #tpu.pipeline_mode<synchronous>, transform_indices = @transform_8, window_bounds = array<i64: 256, 256>}, {pipeline_mode = #tpu.pipeline_mode<synchronous>, transform_indices = @transform_9, window_bounds = array<i64: 1, 256>}, {transform_indices = @transform_10, window_bounds = array<i64: 256, 256>}, {transform_indices = @transform_11, window_bounds = array<i64: 256, 128>}, {transform_indices = @transform_12, window_bounds = array<i64: 256, 128>}]} {
    %c0 = arith.constant 0 : index
    %c0_0 = arith.constant 0 : index
    %0 = vector.load %arg1[%c0, %c0_0] : memref<256x256xf32, #tpu.memory_space<vmem>>, vector<256x256xf32>
    %1 = arith.truncf %0 : vector<256x256xf32> to vector<256x256xbf16>
    %c0_1 = arith.constant 0 : index
    %c0_2 = arith.constant 0 : index
    %2 = vector.load %arg3[%c0_1, %c0_2] : memref<256x256xbf16, #tpu.memory_space<vmem>>, vector<256x256xbf16>
    %cst = arith.constant dense<0.000000e+00> : vector<256x256xf32>
    %3 = tpu.matmul %1, %2, %cst {dimension_numbers = #tpu.dot_dimension_numbers<[1], [0], [0], [1], [0, 0, 1, 1], [], []>} : vector<256x256xbf16>, vector<256x256xbf16>, vector<256x256xf32> -> vector<256x256xf32>
    %c0_3 = arith.constant 0 : index
    %c0_4 = arith.constant 0 : index
    %4 = vector.load %arg4[%c0_3, %c0_4] : memref<1x256xf32, #tpu.memory_space<vmem>>, vector<1x256xf32>
    %5 = vector.broadcast %4 : vector<1x256xf32> to vector<256x256xf32>
    %6 = arith.addf %3, %5 : vector<256x256xf32>
    %cst_5 = arith.constant 0.000000e+00 : f32
    %7 = vector.broadcast %cst_5 : f32 to vector<256x256xf32>
    %8 = arith.maximumf %6, %7 : vector<256x256xf32>
    %9 = arith.truncf %8 : vector<256x256xf32> to vector<256x256xbf16>
    %c0_6 = arith.constant 0 : index
    %c0_7 = arith.constant 0 : index
    %10 = vector.load %arg5[%c0_6, %c0_7] : memref<256x256xbf16, #tpu.memory_space<vmem>>, vector<256x256xbf16>
    %cst_8 = arith.constant dense<0.000000e+00> : vector<256x256xf32>
    %11 = tpu.matmul %9, %10, %cst_8 {dimension_numbers = #tpu.dot_dimension_numbers<[1], [0], [0], [1], [0, 0, 1, 1], [], []>} : vector<256x256xbf16>, vector<256x256xbf16>, vector<256x256xf32> -> vector<256x256xf32>
    %c0_9 = arith.constant 0 : index
    %c0_10 = arith.constant 0 : index
    %12 = vector.load %arg6[%c0_9, %c0_10] : memref<1x256xf32, #tpu.memory_space<vmem>>, vector<1x256xf32>
    %13 = vector.broadcast %12 : vector<1x256xf32> to vector<256x256xf32>
    %14 = arith.addf %11, %13 : vector<256x256xf32>
    %15 = vector.extract_strided_slice %14 {offsets = [0, 0], sizes = [256, 128], strides = [1, 1]} : vector<256x256xf32> to vector<256x128xf32>
    %16 = vector.extract_strided_slice %14 {offsets = [0, 128], sizes = [256, 128], strides = [1, 1]} : vector<256x256xf32> to vector<256x128xf32>
    %c0_11 = arith.constant 0 : index
    %c0_12 = arith.constant 0 : index
    %17 = vector.load %arg2[%c0_11, %c0_12] : memref<256x128xf32, #tpu.memory_space<vmem>>, vector<256x128xf32>
    %18 = arith.mulf %16, %17 : vector<256x128xf32>
    %19 = arith.addf %15, %18 : vector<256x128xf32>
    %20 = arith.truncf %19 : vector<256x128xf32> to vector<256x128xbf16>
    %c0_13 = arith.constant 0 : index
    %c0_14 = arith.constant 0 : index
    %21 = vector.load %arg7[%c0_13, %c0_14] : memref<128x256xbf16, #tpu.memory_space<vmem>>, vector<128x256xbf16>
    %cst_15 = arith.constant dense<0.000000e+00> : vector<256x256xf32>
    %22 = tpu.matmul %20, %21, %cst_15 {dimension_numbers = #tpu.dot_dimension_numbers<[1], [0], [0], [1], [0, 0, 1, 1], [], []>} : vector<256x128xbf16>, vector<128x256xbf16>, vector<256x256xf32> -> vector<256x256xf32>
    %c0_16 = arith.constant 0 : index
    %c0_17 = arith.constant 0 : index
    %23 = vector.load %arg8[%c0_16, %c0_17] : memref<1x256xf32, #tpu.memory_space<vmem>>, vector<1x256xf32>
    %24 = vector.broadcast %23 : vector<1x256xf32> to vector<256x256xf32>
    %25 = arith.addf %22, %24 : vector<256x256xf32>
    %cst_18 = arith.constant 0.000000e+00 : f32
    %26 = vector.broadcast %cst_18 : f32 to vector<256x256xf32>
    %27 = arith.maximumf %25, %26 : vector<256x256xf32>
    %28 = arith.truncf %27 : vector<256x256xf32> to vector<256x256xbf16>
    %c0_19 = arith.constant 0 : index
    %c0_20 = arith.constant 0 : index
    %29 = vector.load %arg9[%c0_19, %c0_20] : memref<256x256xbf16, #tpu.memory_space<vmem>>, vector<256x256xbf16>
    %cst_21 = arith.constant dense<0.000000e+00> : vector<256x256xf32>
    %30 = tpu.matmul %28, %29, %cst_21 {dimension_numbers = #tpu.dot_dimension_numbers<[1], [0], [0], [1], [0, 0, 1, 1], [], []>} : vector<256x256xbf16>, vector<256x256xbf16>, vector<256x256xf32> -> vector<256x256xf32>
    %c0_22 = arith.constant 0 : index
    %c0_23 = arith.constant 0 : index
    %31 = vector.load %arg10[%c0_22, %c0_23] : memref<1x256xf32, #tpu.memory_space<vmem>>, vector<1x256xf32>
    %32 = vector.broadcast %31 : vector<1x256xf32> to vector<256x256xf32>
    %33 = arith.addf %30, %32 : vector<256x256xf32>
    %cst_24 = arith.constant 0.000000e+00 : f32
    %34 = vector.broadcast %cst_24 : f32 to vector<256x256xf32>
    %35 = arith.subf %34, %33 : vector<256x256xf32>
    %36 = math.exp %35 : vector<256x256xf32>
    %cst_25 = arith.constant 1.000000e+00 : f32
    %37 = vector.broadcast %cst_25 : f32 to vector<256x256xf32>
    %38 = arith.addf %37, %36 : vector<256x256xf32>
    %39 = tpu.reciprocal %38 {approx = true} : vector<256x256xf32> -> vector<256x256xf32>
    %c0_26 = arith.constant 0 : index
    %c0_27 = arith.constant 0 : index
    %40 = vector.load %arg11[%c0_26, %c0_27] : memref<256x256xf32, #tpu.memory_space<vmem>>, vector<256x256xf32>
    tpu.vector_store %arg11[%c0_26, %c0_27], %39 {strides = array<i32>} : memref<256x256xf32, #tpu.memory_space<vmem>>, vector<256x256xf32>,
    %c0_28 = arith.constant 0 : index
    %c0_29 = arith.constant 0 : index
    %41 = vector.load %arg12[%c0_28, %c0_29] : memref<256x128xf32, #tpu.memory_space<vmem>>, vector<256x128xf32>
    tpu.vector_store %arg12[%c0_28, %c0_29], %15 {strides = array<i32>} : memref<256x128xf32, #tpu.memory_space<vmem>>, vector<256x128xf32>,
    %c0_30 = arith.constant 0 : index
    %c0_31 = arith.constant 0 : index
    %42 = vector.load %arg13[%c0_30, %c0_31] : memref<256x128xf32, #tpu.memory_space<vmem>>, vector<256x128xf32>
    tpu.vector_store %arg13[%c0_30, %c0_31], %16 {strides = array<i32>} : memref<256x128xf32, #tpu.memory_space<vmem>>, vector<256x128xf32>,
    return
  }
  func.func @transform_0(%arg0: i32) -> (i32, i32) {
    %c0_i32 = arith.constant 0 : i32
    %c0_i32_0 = arith.constant 0 : i32
    return %arg0, %c0_i32 : i32, i32
  }
  func.func @transform_1(%arg0: i32) -> (i32, i32) {
    %c0_i32 = arith.constant 0 : i32
    %c0_i32_0 = arith.constant 0 : i32
    return %arg0, %c0_i32 : i32, i32
  }
  func.func @transform_2(%arg0: i32) -> (i32, i32) {
    %c0_i32 = arith.constant 0 : i32
    %c0_i32_0 = arith.constant 0 : i32
    %c0_i32_1 = arith.constant 0 : i32
    return %c0_i32, %c0_i32_0 : i32, i32
  }
  func.func @transform_3(%arg0: i32) -> (i32, i32) {
    %c0_i32 = arith.constant 0 : i32
    %c0_i32_0 = arith.constant 0 : i32
    %c0_i32_1 = arith.constant 0 : i32
    return %c0_i32, %c0_i32_0 : i32, i32
  }
  func.func @transform_4(%arg0: i32) -> (i32, i32) {
    %c0_i32 = arith.constant 0 : i32
    %c0_i32_0 = arith.constant 0 : i32
    %c0_i32_1 = arith.constant 0 : i32
    return %c0_i32, %c0_i32_0 : i32, i32
  }
  func.func @transform_5(%arg0: i32) -> (i32, i32) {
    %c0_i32 = arith.constant 0 : i32
    %c0_i32_0 = arith.constant 0 : i32
    %c0_i32_1 = arith.constant 0 : i32
    return %c0_i32, %c0_i32_0 : i32, i32
  }
  func.func @transform_6(%arg0: i32) -> (i32, i32) {
    %c0_i32 = arith.constant 0 : i32
    %c0_i32_0 = arith.constant 0 : i32
    %c0_i32_1 = arith.constant 0 : i32
    return %c0_i32, %c0_i32_0 : i32, i32
  }
  func.func @transform_7(%arg0: i32) -> (i32, i32) {
    %c0_i32 = arith.constant 0 : i32
    %c0_i32_0 = arith.constant 0 : i32
    %c0_i32_1 = arith.constant 0 : i32
    return %c0_i32, %c0_i32_0 : i32, i32
  }
  func.func @transform_8(%arg0: i32) -> (i32, i32) {
    %c0_i32 = arith.constant 0 : i32
    %c0_i32_0 = arith.constant 0 : i32
    %c0_i32_1 = arith.constant 0 : i32
    return %c0_i32, %c0_i32_0 : i32, i32
  }
  func.func @transform_9(%arg0: i32) -> (i32, i32) {
    %c0_i32 = arith.constant 0 : i32
    %c0_i32_0 = arith.constant 0 : i32
    %c0_i32_1 = arith.constant 0 : i32
    return %c0_i32, %c0_i32_0 : i32, i32
  }
  func.func @transform_10(%arg0: i32) -> (i32, i32) {
    %c0_i32 = arith.constant 0 : i32
    %c0_i32_0 = arith.constant 0 : i32
    return %arg0, %c0_i32 : i32, i32
  }
  func.func @transform_11(%arg0: i32) -> (i32, i32) {
    %c0_i32 = arith.constant 0 : i32
    %c0_i32_0 = arith.constant 0 : i32
    return %arg0, %c0_i32 : i32, i32
  }
  func.func @transform_12(%arg0: i32) -> (i32, i32) {
    %c0_i32 = arith.constant 0 : i32
    %c0_i32_0 = arith.constant 0 : i32
    return %arg0, %c0_i32 : i32, i32
  }
}

</mosaic_0001>

<llo_original>
// kernel: tpu_custom_call.1
$region0: #{tpu_custom_call.1}
  #allocation0 [shape = 'u32[]', space=smem, size = 0x4, offset = 0x4, fixed_abs, tag = 'smem constant byte address 0x4 - core index']
  #allocation1 [shape = 'u32[144,128]{1,0:T(1,128)}', space=vmem, size = 0x12000, scoped, tag = 'internal scratch']
  %s0 = inlined_call_operand.hbm [shape: f32[512,256], index: 0, kind: input, shape index: {}]
  %s1 = inlined_call_operand.hbm [shape: f32[512,128], index: 1, kind: input, shape index: {}]
  %s2 = inlined_call_operand.hbm [shape: bf16[256,256], index: 2, kind: input, shape index: {}]
  %s3 = inlined_call_operand.vmem [shape: f32[1,256], index: 3, kind: input, shape index: {}]
  %s4 = inlined_call_operand.hbm [shape: bf16[256,256], index: 4, kind: input, shape index: {}]
  %s5 = inlined_call_operand.vmem [shape: f32[1,256], index: 5, kind: input, shape index: {}]
  %s6 = inlined_call_operand.hbm [shape: bf16[128,256], index: 6, kind: input, shape index: {}]
  %s7 = inlined_call_operand.vmem [shape: f32[1,256], index: 7, kind: input, shape index: {}]
  %s8 = inlined_call_operand.hbm [shape: bf16[256,256], index: 8, kind: input, shape index: {}]
  %s9 = inlined_call_operand.vmem [shape: f32[1,256], index: 9, kind: input, shape index: {}]
  %s10 = inlined_call_operand.hbm [shape: f32[512,256], index: 10, kind: output, shape index: {0}]
  %s11 = inlined_call_operand.hbm [shape: f32[512,128], index: 11, kind: output, shape index: {1}]
  %s12 = inlined_call_operand.hbm [shape: f32[512,128], index: 12, kind: output, shape index: {2}]
  %13 = xla_tuple %s10, %s11, %s12
  %s14 = sld [smem:[#allocation0]]
  $region113: #{tpu_custom_call.1} parent=0
    _
  %s16 = ssub.s32 1, %s14
  %s17 = scalar_select 0, %s16, %s14
  $region1: #{tpu_custom_call.1} parent=0
    #allocation2 [shape = 'u8[524288]{0}', space=vmem, size = 0x80000, scoped, tag = 'input window, operand 0']
    #allocation3 [shape = 's32[2]{0}', space=sflag, size = 0x8, scoped, tag = 'scoped memory for tpu_custom_call.1']
    #allocation4 [shape = 's32[2]{0}', space=sflag, size = 0x8, scoped, tag = 'scoped memory for tpu_custom_call.1']
    #allocation5 [shape = 'u8[262144]{0}', space=vmem, size = 0x40000, scoped, tag = 'input window, operand 1']
    #allocation6 [shape = 's32[2]{0}', space=sflag, size = 0x8, scoped, tag = 'scoped memory for tpu_custom_call.1']
    #allocation7 [shape = 'u8[131072]{0}', space=vmem, size = 0x20000, scoped, tag = 'input window, operand 2, single buffered']
    #allocation8 [shape = 'u8[131072]{0}', space=vmem, size = 0x20000, scoped, tag = 'input window, operand 4, single buffered']
    #allocation9 [shape = 's32[1]{0}', space=sflag, size = 0x4, scoped, tag = 'scoped memory for tpu_custom_call.1']
    #allocation10 [shape = 'u8[65536]{0}', space=vmem, size = 0x10000, scoped, tag = 'input window, operand 6, single buffered']
    #allocation11 [shape = 'u8[131072]{0}', space=vmem, size = 0x20000, scoped, tag = 'input window, operand 8, single buffered']
    #allocation12 [shape = 's32[1]{0}', space=sflag, size = 0x4, scoped, tag = 'scoped memory for tpu_custom_call.1']
    #allocation13 [shape = 'u8[524288]{0}', space=vmem, size = 0x80000, scoped, tag = 'output window, operand 0']
    #allocation14 [shape = 'u8[262144]{0}', space=vmem, size = 0x40000, scoped, tag = 'output window, operand 1']
    #allocation15 [shape = 's32[2]{0}', space=sflag, size = 0x8, scoped, tag = 'scoped memory for tpu_custom_call.1']
    #allocation16 [shape = 'u8[262144]{0}', space=vmem, size = 0x40000, scoped, tag = 'output window, operand 2']
    %18 = vsyncpa [#allocation3], 0
    %s19 = scalar_lea.sflag [#allocation3], 1
    %20 = vsyncpa %s19, 0
    %21 = vsyncpa [#allocation6], 0
    %s22 = scalar_lea.sflag [#allocation6], 1
    %23 = vsyncpa %s22, 0
    %24 = vsyncpa [#allocation9], 0
    %25 = vsyncpa [#allocation12], 0
    %26 = vsyncpa [#allocation4], 0
    %s27 = scalar_lea.sflag [#allocation4], 1
    %28 = vsyncpa %s27, 0
    %29 = vsyncpa [#allocation15], 0
    %s30 = scalar_lea.sflag [#allocation15], 1
    %31 = vsyncpa %s30, 0
    loop: start=0, step=1, limit=4
    $region2: #{tpu_custom_call.1} parent=1 // loop_pre_header
      _
    $region3: #{tpu_custom_call.1} parent=1 // loop_header
      %s33 = sphi 0, %s37
      %p34 = scmp.ge.s32.totalorder %s33, 4
      %s43 = sphi 0, %s45
      %s46 = sphi 0, %s43
      %s47 = sphi 0, %s46
      %s63 = sphi 0, %s47
      %s69 = sphi 0, %s71
      %s72 = sphi 0, %s69
      %s73 = sphi 0, %s72
      %s89 = sphi 0, %s73
      %s93 = sphi 0, %s93
      %s95 = sphi 0, %s93
      %s96 = sphi 0, %s95
      %s110 = sphi 0, %s96
      %s114 = sphi 0, %s114
      %s116 = sphi 0, %s114
      %s117 = sphi 0, %s116
      %s131 = sphi 0, %s117
      %s135 = sphi 0, %s135
      %s137 = sphi 0, %s135
      %s138 = sphi 0, %s137
      %s152 = sphi 0, %s138
      %s156 = sphi 0, %s156
      %s158 = sphi 0, %s156
      %s159 = sphi 0, %s158
      %s173 = sphi 0, %s159
      %s177 = sphi 0, %s177
      %s179 = sphi 0, %s177
      %s180 = sphi 0, %s179
      %s194 = sphi 0, %s180
      %s198 = sphi 0, %s198
      %s200 = sphi 0, %s198
      %s201 = sphi 0, %s200
      %s215 = sphi 0, %s201
      %s219 = sphi 0, %s219
      %s221 = sphi 0, %s219
      %s222 = sphi 0, %s221
      %s236 = sphi 0, %s222
      %s240 = sphi 0, %s240
      %s242 = sphi 0, %s240
      %s243 = sphi 0, %s242
      %s257 = sphi 0, %s243
      %s263 = sphi 0, %s265
      %s266 = sphi 0, %s263
      %s267 = sphi 0, %s266
      %s283 = sphi 0, %s267
      %s289 = sphi 0, %s291
      %s292 = sphi 0, %s289
      %s293 = sphi 0, %s292
      %s309 = sphi 0, %s293
      %s315 = sphi 0, %s317
      %s318 = sphi 0, %s315
      %s319 = sphi 0, %s318
      %s335 = sphi 0, %s319
    $region4: #{tpu_custom_call.1} parent=1 // loop_header_branch
      %36 = sbr.rel (%p34) target = $region8
    $region5: #{tpu_custom_call.1} parent=1 // loop_body
      %s38 = ssub.s32 %s33, 1
      %s39 = ssub.s32 %s33, 2
      %s40 = sadd.s32 %s33, 1
      %s41 = ssub.s32 %s33, %s40
      %p42 = scmp.eq.s32.totalorder %s41, 0
      %s44 = sadd.s32 %s43, 1
      %s45 = scalar_select %p42, %s43, %s44
      %p48 = pneg %p42
      %p49 = scmp.eq.s32.totalorder %s33, 1
      %p50 = por %p48, %p49
      %p51 = scmp.ne.s32.totalorder %s43, %s46
      %p52 = scmp.eq.s32.totalorder %s33, 0
      %p53 = por %p51, %p52
      %p54 = scmp.ne.s32.totalorder %s43, %s46
      %p55 = scmp.eq.s32.totalorder %s38, 1
      %p56 = por %p54, %p55
      %p57 = scmp.ne.s32.totalorder %s46, %s47
      %p58 = scmp.eq.s32.totalorder %s38, 0
      %p59 = por %p57, %p58
      %p60 = scmp.ne.s32.totalorder %s46, %s47
      %p61 = scmp.eq.s32.totalorder %s39, 1
      %p62 = por %p60, %p61
      %p64 = scmp.ne.s32.totalorder %s47, %s63
      %p65 = scmp.eq.s32.totalorder %s39, 0
      %p66 = por %p64, %p65
      %s67 = ssub.s32 %s33, %s40
      %p68 = scmp.eq.s32.totalorder %s67, 0
      %s70 = sadd.s32 %s69, 1
      %s71 = scalar_select %p68, %s69, %s70
      %p74 = pneg %p68
      %p75 = scmp.eq.s32.totalorder %s33, 1
      %p76 = por %p74, %p75
      %p77 = scmp.ne.s32.totalorder %s69, %s72
      %p78 = scmp.eq.s32.totalorder %s33, 0
      %p79 = por %p77, %p78
      %p80 = scmp.ne.s32.totalorder %s69, %s72
      %p81 = scmp.eq.s32.totalorder %s38, 1
      %p82 = por %p80, %p81
      %p83 = scmp.ne.s32.totalorder %s72, %s73
      %p84 = scmp.eq.s32.totalorder %s38, 0
      %p85 = por %p83, %p84
      %p86 = scmp.ne.s32.totalorder %s72, %s73
      %p87 = scmp.eq.s32.totalorder %s39, 1
      %p88 = por %p86, %p87
      %p90 = scmp.ne.s32.totalorder %s73, %s89
      %p91 = scmp.eq.s32.totalorder %s39, 0
      %p92 = por %p90, %p91
      %s94 = sadd.s32 %s93, 1
      %p97 = scmp.eq.s32.totalorder %s33, 1
      %p98 = scmp.ne.s32.totalorder %s93, %s95
      %p99 = scmp.eq.s32.totalorder %s33, 0
      %p100 = por %p98, %p99
      %p101 = scmp.ne.s32.totalorder %s93, %s95
      %p102 = scmp.eq.s32.totalorder %s38, 1
      %p103 = por %p101, %p102
      %p104 = scmp.ne.s32.totalorder %s95, %s96
      %p105 = scmp.eq.s32.totalorder %s38, 0
      %p106 = por %p104, %p105
      %p107 = scmp.ne.s32.totalorder %s95, %s96
      %p108 = scmp.eq.s32.totalorder %s39, 1
      %p109 = por %p107, %p108
      %p111 = scmp.ne.s32.totalorder %s96, %s110
      %p112 = scmp.eq.s32.totalorder %s39, 0
      %p113 = por %p111, %p112
      %s115 = sadd.s32 %s114, 1
      %p118 = scmp.eq.s32.totalorder %s33, 1
      %p119 = scmp.ne.s32.totalorder %s114, %s116
      %p120 = scmp.eq.s32.totalorder %s33, 0
      %p121 = por %p119, %p120
      %p122 = scmp.ne.s32.totalorder %s114, %s116
      %p123 = scmp.eq.s32.totalorder %s38, 1
      %p124 = por %p122, %p123
      %p125 = scmp.ne.s32.totalorder %s116, %s117
      %p126 = scmp.eq.s32.totalorder %s38, 0
      %p127 = por %p125, %p126
      %p128 = scmp.ne.s32.totalorder %s116, %s117
      %p129 = scmp.eq.s32.totalorder %s39, 1
      %p130 = por %p128, %p129
      %p132 = scmp.ne.s32.totalorder %s117, %s131
      %p133 = scmp.eq.s32.totalorder %s39, 0
      %p134 = por %p132, %p133
      %s136 = sadd.s32 %s135, 1
      %p139 = scmp.eq.s32.totalorder %s33, 1
      %p140 = scmp.ne.s32.totalorder %s135, %s137
      %p141 = scmp.eq.s32.totalorder %s33, 0
      %p142 = por %p140, %p141
      %p143 = scmp.ne.s32.totalorder %s135, %s137
      %p144 = scmp.eq.s32.totalorder %s38, 1
      %p145 = por %p143, %p144
      %p146 = scmp.ne.s32.totalorder %s137, %s138
      %p147 = scmp.eq.s32.totalorder %s38, 0
      %p148 = por %p146, %p147
      %p149 = scmp.ne.s32.totalorder %s137, %s138
      %p150 = scmp.eq.s32.totalorder %s39, 1
      %p151 = por %p149, %p150
      %p153 = scmp.ne.s32.totalorder %s138, %s152
      %p154 = scmp.eq.s32.totalorder %s39, 0
      %p155 = por %p153, %p154
      %s157 = sadd.s32 %s156, 1
      %p160 = scmp.eq.s32.totalorder %s33, 1
      %p161 = scmp.ne.s32.totalorder %s156, %s158
      %p162 = scmp.eq.s32.totalorder %s33, 0
      %p163 = por %p161, %p162
      %p164 = scmp.ne.s32.totalorder %s156, %s158
      %p165 = scmp.eq.s32.totalorder %s38, 1
      %p166 = por %p164, %p165
      %p167 = scmp.ne.s32.totalorder %s158, %s159
      %p168 = scmp.eq.s32.totalorder %s38, 0
      %p169 = por %p167, %p168
      %p170 = scmp.ne.s32.totalorder %s158, %s159
      %p171 = scmp.eq.s32.totalorder %s39, 1
      %p172 = por %p170, %p171
      %p174 = scmp.ne.s32.totalorder %s159, %s173
      %p175 = scmp.eq.s32.totalorder %s39, 0
      %p176 = por %p174, %p175
      %s178 = sadd.s32 %s177, 1
      %p181 = scmp.eq.s32.totalorder %s33, 1
      %p182 = scmp.ne.s32.totalorder %s177, %s179
      %p183 = scmp.eq.s32.totalorder %s33, 0
      %p184 = por %p182, %p183
      %p185 = scmp.ne.s32.totalorder %s177, %s179
      %p186 = scmp.eq.s32.totalorder %s38, 1
      %p187 = por %p185, %p186
      %p188 = scmp.ne.s32.totalorder %s179, %s180
      %p189 = scmp.eq.s32.totalorder %s38, 0
      %p190 = por %p188, %p189
      %p191 = scmp.ne.s32.totalorder %s179, %s180
      %p192 = scmp.eq.s32.totalorder %s39, 1
      %p193 = por %p191, %p192
      %p195 = scmp.ne.s32.totalorder %s180, %s194
      %p196 = scmp.eq.s32.totalorder %s39, 0
      %p197 = por %p195, %p196
      %s199 = sadd.s32 %s198, 1
      %p202 = scmp.eq.s32.totalorder %s33, 1
      %p203 = scmp.ne.s32.totalorder %s198, %s200
      %p204 = scmp.eq.s32.totalorder %s33, 0
      %p205 = por %p203, %p204
      %p206 = scmp.ne.s32.totalorder %s198, %s200
      %p207 = scmp.eq.s32.totalorder %s38, 1
      %p208 = por %p206, %p207
      %p209 = scmp.ne.s32.totalorder %s200, %s201
      %p210 = scmp.eq.s32.totalorder %s38, 0
      %p211 = por %p209, %p210
      %p212 = scmp.ne.s32.totalorder %s200, %s201
      %p213 = scmp.eq.s32.totalorder %s39, 1
      %p214 = por %p212, %p213
      %p216 = scmp.ne.s32.totalorder %s201, %s215
      %p217 = scmp.eq.s32.totalorder %s39, 0
      %p218 = por %p216, %p217
      %s220 = sadd.s32 %s219, 1
      %p223 = scmp.eq.s32.totalorder %s33, 1
      %p224 = scmp.ne.s32.totalorder %s219, %s221
      %p225 = scmp.eq.s32.totalorder %s33, 0
      %p226 = por %p224, %p225
      %p227 = scmp.ne.s32.totalorder %s219, %s221
      %p228 = scmp.eq.s32.totalorder %s38, 1
      %p229 = por %p227, %p228
      %p230 = scmp.ne.s32.totalorder %s221, %s222
      %p231 = scmp.eq.s32.totalorder %s38, 0
      %p232 = por %p230, %p231
      %p233 = scmp.ne.s32.totalorder %s221, %s222
      %p234 = scmp.eq.s32.totalorder %s39, 1
      %p235 = por %p233, %p234
      %p237 = scmp.ne.s32.totalorder %s222, %s236
      %p238 = scmp.eq.s32.totalorder %s39, 0
      %p239 = por %p237, %p238
      %s241 = sadd.s32 %s240, 1
      %p244 = scmp.eq.s32.totalorder %s33, 1
      %p245 = scmp.ne.s32.totalorder %s240, %s242
      %p246 = scmp.eq.s32.totalorder %s33, 0
      %p247 = por %p245, %p246
      %p248 = scmp.ne.s32.totalorder %s240, %s242
      %p249 = scmp.eq.s32.totalorder %s38, 1
      %p250 = por %p248, %p249
      %p251 = scmp.ne.s32.totalorder %s242, %s243
      %p252 = scmp.eq.s32.totalorder %s38, 0
      %p253 = por %p251, %p252
      %p254 = scmp.ne.s32.totalorder %s242, %s243
      %p255 = scmp.eq.s32.totalorder %s39, 1
      %p256 = por %p254, %p255
      %p258 = scmp.ne.s32.totalorder %s243, %s257
      %p259 = scmp.eq.s32.totalorder %s39, 0
      %p260 = por %p258, %p259
      %s261 = ssub.s32 %s33, %s40
      %p262 = scmp.eq.s32.totalorder %s261, 0
      %s264 = sadd.s32 %s263, 1
      %s265 = scalar_select %p262, %s263, %s264
      %p268 = pneg %p262
      %p269 = scmp.eq.s32.totalorder %s33, 1
      %p270 = por %p268, %p269
      %p271 = scmp.ne.s32.totalorder %s263, %s266
      %p272 = scmp.eq.s32.totalorder %s33, 0
      %p273 = por %p271, %p272
      %p274 = scmp.ne.s32.totalorder %s263, %s266
      %p275 = scmp.eq.s32.totalorder %s38, 1
      %p276 = por %p274, %p275
      %p277 = scmp.ne.s32.totalorder %s266, %s267
      %p278 = scmp.eq.s32.totalorder %s38, 0
      %p279 = por %p277, %p278
      %p280 = scmp.ne.s32.totalorder %s266, %s267
      %p281 = scmp.eq.s32.totalorder %s39, 1
      %p282 = por %p280, %p281
      %p284 = scmp.ne.s32.totalorder %s267, %s283
      %p285 = scmp.eq.s32.totalorder %s39, 0
      %p286 = por %p284, %p285
      %s287 = ssub.s32 %s33, %s40
      %p288 = scmp.eq.s32.totalorder %s287, 0
      %s290 = sadd.s32 %s289, 1
      %s291 = scalar_select %p288, %s289, %s290
      %p294 = pneg %p288
      %p295 = scmp.eq.s32.totalorder %s33, 1
      %p296 = por %p294, %p295
      %p297 = scmp.ne.s32.totalorder %s289, %s292
      %p298 = scmp.eq.s32.totalorder %s33, 0
      %p299 = por %p297, %p298
      %p300 = scmp.ne.s32.totalorder %s289, %s292
      %p301 = scmp.eq.s32.totalorder %s38, 1
      %p302 = por %p300, %p301
      %p303 = scmp.ne.s32.totalorder %s292, %s293
      %p304 = scmp.eq.s32.totalorder %s38, 0
      %p305 = por %p303, %p304
      %p306 = scmp.ne.s32.totalorder %s292, %s293
      %p307 = scmp.eq.s32.totalorder %s39, 1
      %p308 = por %p306, %p307
      %p310 = scmp.ne.s32.totalorder %s293, %s309
      %p311 = scmp.eq.s32.totalorder %s39, 0
      %p312 = por %p310, %p311
      %s313 = ssub.s32 %s33, %s40
      %p314 = scmp.eq.s32.totalorder %s313, 0
      %s316 = sadd.s32 %s315, 1
      %s317 = scalar_select %p314, %s315, %s316
      %p320 = pneg %p314
      %p321 = scmp.eq.s32.totalorder %s33, 1
      %p322 = por %p320, %p321
      %p323 = scmp.ne.s32.totalorder %s315, %s318
      %p324 = scmp.eq.s32.totalorder %s33, 0
      %p325 = por %p323, %p324
      %p326 = scmp.ne.s32.totalorder %s315, %s318
      %p327 = scmp.eq.s32.totalorder %s38, 1
      %p328 = por %p326, %p327
      %p329 = scmp.ne.s32.totalorder %s318, %s319
      %p330 = scmp.eq.s32.totalorder %s38, 0
      %p331 = por %p329, %p330
      %p332 = scmp.ne.s32.totalorder %s318, %s319
      %p333 = scmp.eq.s32.totalorder %s39, 1
      %p334 = por %p332, %p333
      %p336 = scmp.ne.s32.totalorder %s319, %s335
      %p337 = scmp.eq.s32.totalorder %s39, 0
      %p338 = por %p336, %p337
      %p339 = scmp.le.s32.totalorder 1, %s33
      %p340 = scmp.lt.s32.totalorder %s33, 3
      %p341 = pnand %p339, %p340
      %p342 = pneg %p341
      // Predicated region
      $region9: #{tpu_custom_call.1} parent=5 // pred_check
        _
      $region10: #{tpu_custom_call.1} parent=5 // pred_check_branch
        %344 = sbr.rel (%p341) target = $region12
      $region11: #{tpu_custom_call.1} parent=5 // pred_region
        %s345 = ssub.s32 %s33, 1
        // Predicated region
        $region13: #{tpu_custom_call.1} parent=11 // pred_check
          %p346 = pneg %p106
        $region14: #{tpu_custom_call.1} parent=11 // pred_check_branch
          %348 = sbr.rel (%p346) target = $region16
        $region15: #{tpu_custom_call.1} parent=11 // pred_region
          %s350 = ssub.s32 4096, 4096
          %351 = vsyncadd [#allocation6], %s350
          %s352 = sshll.u32 [#allocation7], 4
          %s353 = int_to_ptr.vmem [resolvable:$true] %s352
          %358 = dma.hbm_to_vmem [thread:$0]  %s2, 4096, %s353, [#allocation6], 128, 128, 8
        $region16: #{tpu_custom_call.1} parent=11 // pred_fallthru
          _
        // Predicated region
        $region17: #{tpu_custom_call.1} parent=11 // pred_check
          %p359 = pneg %p127
        $region18: #{tpu_custom_call.1} parent=11 // pred_check_branch
          %361 = sbr.rel (%p359) target = $region20
        $region19: #{tpu_custom_call.1} parent=11 // pred_region
          _
        $region20: #{tpu_custom_call.1} parent=11 // pred_fallthru
          _
        // Predicated region
        $region21: #{tpu_custom_call.1} parent=11 // pred_check
          %p362 = pneg %p148
        $region22: #{tpu_custom_call.1} parent=11 // pred_check_branch
          %364 = sbr.rel (%p362) target = $region24
        $region23: #{tpu_custom_call.1} parent=11 // pred_region
          %s366 = ssub.s32 4096, 4096
          %367 = vsyncadd [#allocation9], %s366
          %s368 = sshll.u32 [#allocation8], 4
          %s369 = int_to_ptr.vmem [resolvable:$true] %s368
          %374 = dma.hbm_to_vmem [thread:$0]  %s4, 4096, %s369, [#allocation9], 128, 128, 8
        $region24: #{tpu_custom_call.1} parent=11 // pred_fallthru
          _
        // Predicated region
        $region25: #{tpu_custom_call.1} parent=11 // pred_check
          %p375 = pneg %p169
        $region26: #{tpu_custom_call.1} parent=11 // pred_check_branch
          %377 = sbr.rel (%p375) target = $region28
        $region27: #{tpu_custom_call.1} parent=11 // pred_region
          _
        $region28: #{tpu_custom_call.1} parent=11 // pred_fallthru
          _
        // Predicated region
        $region29: #{tpu_custom_call.1} parent=11 // pred_check
          %p378 = pneg %p190
        $region30: #{tpu_custom_call.1} parent=11 // pred_check_branch
          %380 = sbr.rel (%p378) target = $region32
        $region31: #{tpu_custom_call.1} parent=11 // pred_region
          %s382 = ssub.s32 2048, 2048
          %383 = vsyncadd [#allocation9], %s382
          %s384 = sshll.u32 [#allocation10], 4
          %s385 = int_to_ptr.vmem [resolvable:$true] %s384
          %390 = dma.hbm_to_vmem [thread:$0]  %s6, 2048, %s385, [#allocation9], 128, 128, 8
        $region32: #{tpu_custom_call.1} parent=11 // pred_fallthru
          _
        // Predicated region
        $region33: #{tpu_custom_call.1} parent=11 // pred_check
          %p391 = pneg %p211
        $region34: #{tpu_custom_call.1} parent=11 // pred_check_branch
          %393 = sbr.rel (%p391) target = $region36
        $region35: #{tpu_custom_call.1} parent=11 // pred_region
          _
        $region36: #{tpu_custom_call.1} parent=11 // pred_fallthru
          _
        // Predicated region
        $region37: #{tpu_custom_call.1} parent=11 // pred_check
          %p394 = pneg %p232
        $region38: #{tpu_custom_call.1} parent=11 // pred_check_branch
          %396 = sbr.rel (%p394) target = $region40
        $region39: #{tpu_custom_call.1} parent=11 // pred_region
          %s398 = ssub.s32 4096, 4096
          %399 = vsyncadd [#allocation12], %s398
          %s400 = sshll.u32 [#allocation11], 4
          %s401 = int_to_ptr.vmem [resolvable:$true] %s400
          %406 = dma.hbm_to_vmem [thread:$0]  %s8, 4096, %s401, [#allocation12], 128, 128, 8
        $region40: #{tpu_custom_call.1} parent=11 // pred_fallthru
          _
        // Predicated region
        $region41: #{tpu_custom_call.1} parent=11 // pred_check
          %p407 = pneg %p253
        $region42: #{tpu_custom_call.1} parent=11 // pred_check_branch
          %409 = sbr.rel (%p407) target = $region44
        $region43: #{tpu_custom_call.1} parent=11 // pred_region
          _
        $region44: #{tpu_custom_call.1} parent=11 // pred_fallthru
          _
      $region12: #{tpu_custom_call.1} parent=5 // pred_fallthru
        _
      %p410 = scmp.lt.s32.totalorder %s33, 2
      // Predicated region
      $region45: #{tpu_custom_call.1} parent=5 // pred_check
        %p411 = pneg %p410
      $region46: #{tpu_custom_call.1} parent=5 // pred_check_branch
        %413 = sbr.rel (%p411) target = $region48
      $region47: #{tpu_custom_call.1} parent=5 // pred_region
        // Predicated region
        $region49: #{tpu_custom_call.1} parent=47 // pred_check
          %p414 = pneg %p53
        $region50: #{tpu_custom_call.1} parent=47 // pred_check_branch
          %416 = sbr.rel (%p414) target = $region52
        $region51: #{tpu_custom_call.1} parent=47 // pred_region
          %s417 = sand.u32 %s43, 1
          %s418 = scalar_lea.sflag [#allocation3], %s417
          %s419 = sand.u32 %s43, 1
          %s420 = smul.addr %s419, 512
          %s421 = scalar_lea.vmem [#allocation2], %s420
          %s422 = smul.u32 32, %s33
          %s424 = ssub.s32 8192, 8192
          %425 = vsyncadd %s418, %s424
          %s426 = smul.addr %s422, 2
          %s427 = smul.addr %s426, 128
          %s428 = scalar_lea.hbm %s0, %s427
          %s429 = sshll.u32 %s421, 4
          %s430 = int_to_ptr.vmem [resolvable:$true] %s429
          %435 = dma.hbm_to_vmem [thread:$0]  %s428, 8192, %s430, %s418, 256, 256, 16
        $region52: #{tpu_custom_call.1} parent=47 // pred_fallthru
          _
        // Predicated region
        $region53: #{tpu_custom_call.1} parent=47 // pred_check
          %p436 = pneg %p79
        $region54: #{tpu_custom_call.1} parent=47 // pred_check_branch
          %438 = sbr.rel (%p436) target = $region56
        $region55: #{tpu_custom_call.1} parent=47 // pred_region
          %s439 = sand.u32 %s33, 1
          %s440 = scalar_lea.sflag [#allocation6], %s439
          %s441 = sand.u32 %s69, 1
          %s442 = smul.addr %s441, 256
          %s443 = scalar_lea.vmem [#allocation5], %s442
          %s444 = smul.u32 32, %s33
          %s446 = ssub.s32 4096, 4096
          %447 = vsyncadd %s440, %s446
          %s448 = smul.addr %s444, 128
          %s449 = scalar_lea.hbm %s1, %s448
          %s450 = sshll.u32 %s443, 4
          %s451 = int_to_ptr.vmem [resolvable:$true] %s450
          %456 = dma.hbm_to_vmem [thread:$0]  %s449, 4096, %s451, %s440, 128, 128, 8
        $region56: #{tpu_custom_call.1} parent=47 // pred_fallthru
          _
      $region48: #{tpu_custom_call.1} parent=5 // pred_fallthru
        _
      %p457 = scmp.le.s32.totalorder 1, %s33
      %p458 = scmp.lt.s32.totalorder %s33, 3
      %p459 = pnand %p457, %p458
      %p460 = pneg %p459
      // Predicated region
      $region57: #{tpu_custom_call.1} parent=5 // pred_check
        _
      $region58: #{tpu_custom_call.1} parent=5 // pred_check_branch
        %462 = sbr.rel (%p459) target = $region60
      $region59: #{tpu_custom_call.1} parent=5 // pred_region
        %s463 = ssub.s32 %s33, 1
        %s464 = sand.u32 %s46, 1
        %s465 = scalar_lea.sflag [#allocation3], %s464
        %s466 = sand.u32 %s46, 1
        %s467 = smul.addr %s466, 512
        %s468 = scalar_lea.vmem [#allocation2], %s467
        // Predicated region
        $region61: #{tpu_custom_call.1} parent=59 // pred_check
          %p469 = pneg %p59
        $region62: #{tpu_custom_call.1} parent=59 // pred_check_branch
          %471 = sbr.rel (%p469) target = $region64
        $region63: #{tpu_custom_call.1} parent=59 // pred_region
          %472 = dma.done %s465, 8192
        $region64: #{tpu_custom_call.1} parent=59 // pred_fallthru
          _
        %s473 = sand.u32 %s38, 1
        %s474 = scalar_lea.sflag [#allocation6], %s473
        %s475 = sand.u32 %s72, 1
        %s476 = smul.addr %s475, 256
        %s477 = scalar_lea.vmem [#allocation5], %s476
        // Predicated region
        $region65: #{tpu_custom_call.1} parent=59 // pred_check
          %p478 = pneg %p85
        $region66: #{tpu_custom_call.1} parent=59 // pred_check_branch
          %480 = sbr.rel (%p478) target = $region68
        $region67: #{tpu_custom_call.1} parent=59 // pred_region
          %481 = dma.done %s474, 4096
        $region68: #{tpu_custom_call.1} parent=59 // pred_fallthru
          _
        // Predicated region
        $region69: #{tpu_custom_call.1} parent=59 // pred_check
          %p482 = pneg %p106
        $region70: #{tpu_custom_call.1} parent=59 // pred_check_branch
          %484 = sbr.rel (%p482) target = $region72
        $region71: #{tpu_custom_call.1} parent=59 // pred_region
          %485 = dma.done [#allocation6], 4096
        $region72: #{tpu_custom_call.1} parent=59 // pred_fallthru
          _
        // Predicated region
        $region73: #{tpu_custom_call.1} parent=59 // pred_check
          %p486 = pneg %p148
        $region74: #{tpu_custom_call.1} parent=59 // pred_check_branch
          %488 = sbr.rel (%p486) target = $region76
        $region75: #{tpu_custom_call.1} parent=59 // pred_region
          %489 = dma.done [#allocation9], 4096
        $region76: #{tpu_custom_call.1} parent=59 // pred_fallthru
          _
        // Predicated region
        $region77: #{tpu_custom_call.1} parent=59 // pred_check
          %p490 = pneg %p190
        $region78: #{tpu_custom_call.1} parent=59 // pred_check_branch
          %492 = sbr.rel (%p490) target = $region80
        $region79: #{tpu_custom_call.1} parent=59 // pred_region
          %493 = dma.done [#allocation9], 2048
        $region80: #{tpu_custom_call.1} parent=59 // pred_fallthru
          _
        // Predicated region
        $region81: #{tpu_custom_call.1} parent=59 // pred_check
          %p494 = pneg %p232
        $region82: #{tpu_custom_call.1} parent=59 // pred_check_branch
          %496 = sbr.rel (%p494) target = $region84
        $region83: #{tpu_custom_call.1} parent=59 // pred_region
          %497 = dma.done [#allocation12], 4096
        $region84: #{tpu_custom_call.1} parent=59 // pred_fallthru
          _
        %s498 = sand.u32 %s46, 1
        %s499 = scalar_lea.sflag [#allocation3], %s498
        %s500 = sand.u32 %s46, 1
        %s501 = smul.addr %s500, 512
        %s502 = scalar_lea.vmem [#allocation2], %s501
        %p503 = pneg %p59
        %p504 = pneg %p56
        %s505 = sand.u32 %s38, 1
        %s506 = scalar_lea.sflag [#allocation6], %s505
        %s507 = sand.u32 %s72, 1
        %s508 = smul.addr %s507, 256
        %s509 = scalar_lea.vmem [#allocation5], %s508
        %p510 = pneg %p85
        %p511 = pneg %p82
        %p512 = pneg %p106
        %p513 = pneg %p103
        %p514 = pneg %p127
        %p515 = pneg %p124
        %p516 = pneg %p148
        %p517 = pneg %p145
        %p518 = pneg %p169
        %p519 = pneg %p166
        %p520 = pneg %p190
        %p521 = pneg %p187
        %p522 = pneg %p211
        %p523 = pneg %p208
        %p524 = pneg %p232
        %p525 = pneg %p229
        %p526 = pneg %p253
        %p527 = pneg %p250
        %p528 = pneg %p279
        %p529 = pneg %p276
        %s530 = sand.u32 %s266, 1
        %s531 = scalar_lea.sflag [#allocation4], %s530
        %s532 = sand.u32 %s266, 1
        %s533 = smul.addr %s532, 512
        %s534 = scalar_lea.vmem [#allocation13], %s533
        %p535 = pneg %p305
        %p536 = pneg %p302
        %s537 = sand.u32 %s38, 1
        %s538 = scalar_lea.sflag [#allocation15], %s537
        %s539 = sand.u32 %s292, 1
        %s540 = smul.addr %s539, 256
        %s541 = scalar_lea.vmem [#allocation14], %s540
        %p542 = pneg %p331
        %p543 = pneg %p328
        %s544 = sand.u32 %s38, 1
        %s545 = scalar_lea.sflag [#allocation15], %s544
        %s546 = sand.u32 %s318, 1
        %s547 = smul.addr %s546, 256
        %s548 = scalar_lea.vmem [#allocation16], %s547
        %s549 = smul.u32 32, %s38
        %s550 = smul.u32 32, %s38
        %s551 = smul.u32 32, %s38
        %s552 = smul.u32 32, %s38
        %s553 = smul.u32 32, %s38
        %v555 = vld [vmem:[%s468] sm:$0xff]
        %v556 = vld [vmem:[%s468 + $0x8] sm:$0xff]
        %v557 = vld [vmem:[%s468 + $0x10] sm:$0xff]
        %v558 = vld [vmem:[%s468 + $0x18] sm:$0xff]
        %v559 = vld [vmem:[%s468 + $0x20] sm:$0xff]
        %v560 = vld [vmem:[%s468 + $0x28] sm:$0xff]
        %v561 = vld [vmem:[%s468 + $0x30] sm:$0xff]
        %v562 = vld [vmem:[%s468 + $0x38] sm:$0xff]
        %v563 = vld [vmem:[%s468 + $0x40] sm:$0xff]
        %v564 = vld [vmem:[%s468 + $0x48] sm:$0xff]
        %v565 = vld [vmem:[%s468 + $0x50] sm:$0xff]
        %v566 = vld [vmem:[%s468 + $0x58] sm:$0xff]
        %v567 = vld [vmem:[%s468 + $0x60] sm:$0xff]
        %v568 = vld [vmem:[%s468 + $0x68] sm:$0xff]
        %v569 = vld [vmem:[%s468 + $0x70] sm:$0xff]
        %v570 = vld [vmem:[%s468 + $0x78] sm:$0xff]
        %v571 = vld [vmem:[%s468 + $0x80] sm:$0xff]
        %v572 = vld [vmem:[%s468 + $0x88] sm:$0xff]
        %v573 = vld [vmem:[%s468 + $0x90] sm:$0xff]
        %v574 = vld [vmem:[%s468 + $0x98] sm:$0xff]
        %v575 = vld [vmem:[%s468 + $0xa0] sm:$0xff]
        %v576 = vld [vmem:[%s468 + $0xa8] sm:$0xff]
        %v577 = vld [vmem:[%s468 + $0xb0] sm:$0xff]
        %v578 = vld [vmem:[%s468 + $0xb8] sm:$0xff]
        %v579 = vld [vmem:[%s468 + $0xc0] sm:$0xff]
        %v580 = vld [vmem:[%s468 + $0xc8] sm:$0xff]
        %v581 = vld [vmem:[%s468 + $0xd0] sm:$0xff]
        %v582 = vld [vmem:[%s468 + $0xd8] sm:$0xff]
        %v583 = vld [vmem:[%s468 + $0xe0] sm:$0xff]
        %v584 = vld [vmem:[%s468 + $0xe8] sm:$0xff]
        %v585 = vld [vmem:[%s468 + $0xf0] sm:$0xff]
        %v586 = vld [vmem:[%s468 + $0xf8] sm:$0xff]
        %v587 = vld [vmem:[%s468 + $0x100] sm:$0xff]
        %v588 = vld [vmem:[%s468 + $0x108] sm:$0xff]
        %v589 = vld [vmem:[%s468 + $0x110] sm:$0xff]
        %v590 = vld [vmem:[%s468 + $0x118] sm:$0xff]
        %v591 = vld [vmem:[%s468 + $0x120] sm:$0xff]
        %v592 = vld [vmem:[%s468 + $0x128] sm:$0xff]
        %v593 = vld [vmem:[%s468 + $0x130] sm:$0xff]
        %v594 = vld [vmem:[%s468 + $0x138] sm:$0xff]
        %v595 = vld [vmem:[%s468 + $0x140] sm:$0xff]
        %v596 = vld [vmem:[%s468 + $0x148] sm:$0xff]
        %v597 = vld [vmem:[%s468 + $0x150] sm:$0xff]
        %v598 = vld [vmem:[%s468 + $0x158] sm:$0xff]
        %v599 = vld [vmem:[%s468 + $0x160] sm:$0xff]
        %v600 = vld [vmem:[%s468 + $0x168] sm:$0xff]
        %v601 = vld [vmem:[%s468 + $0x170] sm:$0xff]
        %v602 = vld [vmem:[%s468 + $0x178] sm:$0xff]
        %v603 = vld [vmem:[%s468 + $0x180] sm:$0xff]
        %v604 = vld [vmem:[%s468 + $0x188] sm:$0xff]
        %v605 = vld [vmem:[%s468 + $0x190] sm:$0xff]
        %v606 = vld [vmem:[%s468 + $0x198] sm:$0xff]
        %v607 = vld [vmem:[%s468 + $0x1a0] sm:$0xff]
        %v608 = vld [vmem:[%s468 + $0x1a8] sm:$0xff]
        %v609 = vld [vmem:[%s468 + $0x1b0] sm:$0xff]
        %v610 = vld [vmem:[%s468 + $0x1b8] sm:$0xff]
        %v611 = vld [vmem:[%s468 + $0x1c0] sm:$0xff]
        %v612 = vld [vmem:[%s468 + $0x1c8] sm:$0xff]
        %v613 = vld [vmem:[%s468 + $0x1d0] sm:$0xff]
        %v614 = vld [vmem:[%s468 + $0x1d8] sm:$0xff]
        %v615 = vld [vmem:[%s468 + $0x1e0] sm:$0xff]
        %v616 = vld [vmem:[%s468 + $0x1e8] sm:$0xff]
        %v617 = vld [vmem:[%s468 + $0x1f0] sm:$0xff]
        %v618 = vld [vmem:[%s468 + $0x1f8] sm:$0xff]
        %v619 = vpack.c.bf16 %v557, %v555
        %v620 = vpack.c.bf16 %v558, %v556
        %v621 = vpack.c.bf16 %v561, %v559
        %v622 = vpack.c.bf16 %v562, %v560
        %v623 = vpack.c.bf16 %v565, %v563
        %v624 = vpack.c.bf16 %v566, %v564
        %v625 = vpack.c.bf16 %v569, %v567
        %v626 = vpack.c.bf16 %v570, %v568
        %v627 = vpack.c.bf16 %v573, %v571
        %v628 = vpack.c.bf16 %v574, %v572
        %v629 = vpack.c.bf16 %v577, %v575
        %v630 = vpack.c.bf16 %v578, %v576
        %v631 = vpack.c.bf16 %v581, %v579
        %v632 = vpack.c.bf16 %v582, %v580
        %v633 = vpack.c.bf16 %v585, %v583
        %v634 = vpack.c.bf16 %v586, %v584
        %v635 = vpack.c.bf16 %v589, %v587
        %v636 = vpack.c.bf16 %v590, %v588
        %v637 = vpack.c.bf16 %v593, %v591
        %v638 = vpack.c.bf16 %v594, %v592
        %v639 = vpack.c.bf16 %v597, %v595
        %v640 = vpack.c.bf16 %v598, %v596
        %v641 = vpack.c.bf16 %v601, %v599
        %v642 = vpack.c.bf16 %v602, %v600
        %v643 = vpack.c.bf16 %v605, %v603
        %v644 = vpack.c.bf16 %v606, %v604
        %v645 = vpack.c.bf16 %v609, %v607
        %v646 = vpack.c.bf16 %v610, %v608
        %v647 = vpack.c.bf16 %v613, %v611
        %v648 = vpack.c.bf16 %v614, %v612
        %v649 = vpack.c.bf16 %v617, %v615
        %v650 = vpack.c.bf16 %v618, %v616
        %v651 = vld [vmem:[#allocation7] sm:$0xff]
        %v652 = vld [vmem:[#allocation7 + $0x8] sm:$0xff]
        %v653 = vld [vmem:[#allocation7 + $0x10] sm:$0xff]
        %v654 = vld [vmem:[#allocation7 + $0x18] sm:$0xff]
        %v655 = vld [vmem:[#allocation7 + $0x20] sm:$0xff]
        %v656 = vld [vmem:[#allocation7 + $0x28] sm:$0xff]
        %v657 = vld [vmem:[#allocation7 + $0x30] sm:$0xff]
        %v658 = vld [vmem:[#allocation7 + $0x38] sm:$0xff]
        %v659 = vld [vmem:[#allocation7 + $0x40] sm:$0xff]
        %v660 = vld [vmem:[#allocation7 + $0x48] sm:$0xff]
        %v661 = vld [vmem:[#allocation7 + $0x50] sm:$0xff]
        %v662 = vld [vmem:[#allocation7 + $0x58] sm:$0xff]
        %v663 = vld [vmem:[#allocation7 + $0x60] sm:$0xff]
        %v664 = vld [vmem:[#allocation7 + $0x68] sm:$0xff]
        %v665 = vld [vmem:[#allocation7 + $0x70] sm:$0xff]
        %v666 = vld [vmem:[#allocation7 + $0x78] sm:$0xff]
        %v667 = vld [vmem:[#allocation7 + $0x80] sm:$0xff]
        %v668 = vld [vmem:[#allocation7 + $0x88] sm:$0xff]
        %v669 = vld [vmem:[#allocation7 + $0x90] sm:$0xff]
        %v670 = vld [vmem:[#allocation7 + $0x98] sm:$0xff]
        %v671 = vld [vmem:[#allocation7 + $0xa0] sm:$0xff]
        %v672 = vld [vmem:[#allocation7 + $0xa8] sm:$0xff]
        %v673 = vld [vmem:[#allocation7 + $0xb0] sm:$0xff]
        %v674 = vld [vmem:[#allocation7 + $0xb8] sm:$0xff]
        %v675 = vld [vmem:[#allocation7 + $0xc0] sm:$0xff]
        %v676 = vld [vmem:[#allocation7 + $0xc8] sm:$0xff]
        %v677 = vld [vmem:[#allocation7 + $0xd0] sm:$0xff]
        %v678 = vld [vmem:[#allocation7 + $0xd8] sm:$0xff]
        %v679 = vld [vmem:[#allocation7 + $0xe0] sm:$0xff]
        %v680 = vld [vmem:[#allocation7 + $0xe8] sm:$0xff]
        %v681 = vld [vmem:[#allocation7 + $0xf0] sm:$0xff]
        %v682 = vld [vmem:[#allocation7 + $0xf8] sm:$0xff]
        %v683 = vld [vmem:[%s3] sm:$0x3]
        %v685 = vlaneseq
        %v686 = vshrl.u32 %v685, 7
        %v687 = vsub.s32 0, %v686
        %v688 = vrot.slane %v683, %v687
        %v689 = vlaneseq
        %v690 = vshrl.u32 %v689, 7
        %v691 = vsub.s32 1, %v690
        %v692 = vrot.slane %v683, %v691
        %v727 = vunpack.c.l.b16 %v651
        %v728 = vunpack.c.h.b16 %v651
        %v729 = vunpack.c.l.b16 %v652
        %v730 = vunpack.c.h.b16 %v652
        %v731 = vunpack.c.l.b16 %v653
        %v732 = vunpack.c.h.b16 %v653
        %v733 = vunpack.c.l.b16 %v654
        %v734 = vunpack.c.h.b16 %v654
        %v735 = vunpack.c.l.b16 %v655
        %v736 = vunpack.c.h.b16 %v655
        %v737 = vunpack.c.l.b16 %v656
        %v738 = vunpack.c.h.b16 %v656
        %v739 = vunpack.c.l.b16 %v657
        %v740 = vunpack.c.h.b16 %v657
        %v741 = vunpack.c.l.b16 %v658
        %v742 = vunpack.c.h.b16 %v658
        %v743 = vunpack.c.l.b16 %v659
        %v744 = vunpack.c.h.b16 %v659
        %v745 = vunpack.c.l.b16 %v660
        %v746 = vunpack.c.h.b16 %v660
        %v747 = vunpack.c.l.b16 %v661
        %v748 = vunpack.c.h.b16 %v661
        %v749 = vunpack.c.l.b16 %v662
        %v750 = vunpack.c.h.b16 %v662
        %v751 = vunpack.c.l.b16 %v663
        %v752 = vunpack.c.h.b16 %v663
        %v753 = vunpack.c.l.b16 %v664
        %v754 = vunpack.c.h.b16 %v664
        %v755 = vunpack.c.l.b16 %v665
        %v756 = vunpack.c.h.b16 %v665
        %v757 = vunpack.c.l.b16 %v666
        %v758 = vunpack.c.h.b16 %v666
        %v759 = vunpack.c.l.b16 %v667
        %v760 = vunpack.c.h.b16 %v667
        %v761 = vunpack.c.l.b16 %v668
        %v762 = vunpack.c.h.b16 %v668
        %v763 = vunpack.c.l.b16 %v669
        %v764 = vunpack.c.h.b16 %v669
        %v765 = vunpack.c.l.b16 %v670
        %v766 = vunpack.c.h.b16 %v670
        %v767 = vunpack.c.l.b16 %v671
        %v768 = vunpack.c.h.b16 %v671
        %v769 = vunpack.c.l.b16 %v672
        %v770 = vunpack.c.h.b16 %v672
        %v771 = vunpack.c.l.b16 %v673
        %v772 = vunpack.c.h.b16 %v673
        %v773 = vunpack.c.l.b16 %v674
        %v774 = vunpack.c.h.b16 %v674
        %v775 = vunpack.c.l.b16 %v675
        %v776 = vunpack.c.h.b16 %v675
        %v777 = vunpack.c.l.b16 %v676
        %v778 = vunpack.c.h.b16 %v676
        %v779 = vunpack.c.l.b16 %v677
        %v780 = vunpack.c.h.b16 %v677
        %v781 = vunpack.c.l.b16 %v678
        %v782 = vunpack.c.h.b16 %v678
        %v783 = vunpack.c.l.b16 %v679
        %v784 = vunpack.c.h.b16 %v679
        %v785 = vunpack.c.l.b16 %v680
        %v786 = vunpack.c.h.b16 %v680
        %v787 = vunpack.c.l.b16 %v681
        %v788 = vunpack.c.h.b16 %v681
        %v789 = vunpack.c.l.b16 %v682
        %v790 = vunpack.c.h.b16 %v682
        %v791 = vpack.c.b16 %v729, %v727
        %v792 = vpack.c.b16 %v730, %v728
        %v793 = vpack.c.b16 %v733, %v731
        %v794 = vpack.c.b16 %v734, %v732
        %v795 = vpack.c.b16 %v737, %v735
        %v796 = vpack.c.b16 %v738, %v736
        %v797 = vpack.c.b16 %v741, %v739
        %v798 = vpack.c.b16 %v742, %v740
        %v799 = vpack.c.b16 %v745, %v743
        %v800 = vpack.c.b16 %v746, %v744
        %v801 = vpack.c.b16 %v749, %v747
        %v802 = vpack.c.b16 %v750, %v748
        %v803 = vpack.c.b16 %v753, %v751
        %v804 = vpack.c.b16 %v754, %v752
        %v805 = vpack.c.b16 %v757, %v755
        %v806 = vpack.c.b16 %v758, %v756
        %v807 = vpack.c.b16 %v761, %v759
        %v808 = vpack.c.b16 %v762, %v760
        %v809 = vpack.c.b16 %v765, %v763
        %v810 = vpack.c.b16 %v766, %v764
        %v811 = vpack.c.b16 %v769, %v767
        %v812 = vpack.c.b16 %v770, %v768
        %v813 = vpack.c.b16 %v773, %v771
        %v814 = vpack.c.b16 %v774, %v772
        %v815 = vpack.c.b16 %v777, %v775
        %v816 = vpack.c.b16 %v778, %v776
        %v817 = vpack.c.b16 %v781, %v779
        %v818 = vpack.c.b16 %v782, %v780
        %v819 = vpack.c.b16 %v785, %v783
        %v820 = vpack.c.b16 %v786, %v784
        %v821 = vpack.c.b16 %v789, %v787
        %v822 = vpack.c.b16 %v790, %v788
        %855 = vmatprep.subr.bf16.mxu0 %v792
        %856 = vmatpush1.bf16.msra.mxu0 %v791
        %857 = vmatprep.subr.bf16.mxu0 %v794
        %858 = vmatpush1.bf16.msra.mxu0 %v793
        %859 = vmatprep.subr.bf16.mxu0 %v796
        %860 = vmatpush1.bf16.msra.mxu0 %v795
        %861 = vmatprep.subr.bf16.mxu0 %v798
        %862 = vmatpush1.bf16.msra.mxu0 %v797
        %863 = vmatprep.subr.bf16.mxu0 %v800
        %864 = vmatpush1.bf16.msra.mxu0 %v799
        %865 = vmatprep.subr.bf16.mxu0 %v802
        %866 = vmatpush1.bf16.msra.mxu0 %v801
        %867 = vmatprep.subr.bf16.mxu0 %v804
        %868 = vmatpush1.bf16.msra.mxu0 %v803
        %869 = vmatprep.subr.bf16.mxu0 %v806
        %870 = vmatpush1.bf16.msra.mxu0 %v805
        %871 = vmatprep.subr.bf16.mxu0 %v808
        %872 = vmatpush1.bf16.msra.mxu0 %v807
        %873 = vmatprep.subr.bf16.mxu0 %v810
        %874 = vmatpush1.bf16.msra.mxu0 %v809
        %875 = vmatprep.subr.bf16.mxu0 %v812
        %876 = vmatpush1.bf16.msra.mxu0 %v811
        %877 = vmatprep.subr.bf16.mxu0 %v814
        %878 = vmatpush1.bf16.msra.mxu0 %v813
        %879 = vmatprep.subr.bf16.mxu0 %v816
        %880 = vmatpush1.bf16.msra.mxu0 %v815
        %881 = vmatprep.subr.bf16.mxu0 %v818
        %882 = vmatpush1.bf16.msra.mxu0 %v817
        %883 = vmatprep.subr.bf16.mxu0 %v820
        %884 = vmatpush1.bf16.msra.mxu0 %v819
        %885 = vmatprep.subr.bf16.mxu0 %v822
        %886 = vmatpush1.bf16.msra.mxu0 %v821
        %887 = vmatprep.mubr.bf16.mxu0 %v620
        %888 = vmatmul.mubr.bf16.gmra.mrb[0].mxu0 %v619
        %v889 = vpop.f32.mrb[0].mxu0
        %v890 = vadd.f32 %v688, %v889
        %v891 = vpop.f32.mrb[0].mxu0
        %v892 = vadd.f32 %v692, %v891
        %v893 = vpop.f32.mrb[0].mxu0
        %v894 = vadd.f32 %v688, %v893
        %v895 = vpop.f32.mrb[0].mxu0
        %v896 = vadd.f32 %v692, %v895
        %897 = vmatprep.mubr.bf16.mxu0 %v622
        %898 = vmatmul.mubr.bf16.gmra.mrb[0].mxu0 %v621
        %v899 = vpop.f32.mrb[0].mxu0
        %v900 = vadd.f32 %v688, %v899
        %v901 = vpop.f32.mrb[0].mxu0
        %v902 = vadd.f32 %v692, %v901
        %v903 = vpop.f32.mrb[0].mxu0
        %v904 = vadd.f32 %v688, %v903
        %v905 = vpop.f32.mrb[0].mxu0
        %v906 = vadd.f32 %v692, %v905
        %907 = vmatprep.mubr.bf16.mxu0 %v624
        %908 = vmatmul.mubr.bf16.gmra.mrb[0].mxu0 %v623
        %v909 = vpop.f32.mrb[0].mxu0
        %v910 = vadd.f32 %v688, %v909
        %v911 = vpop.f32.mrb[0].mxu0
        %v912 = vadd.f32 %v692, %v911
        %v913 = vpop.f32.mrb[0].mxu0
        %v914 = vadd.f32 %v688, %v913
        %v915 = vpop.f32.mrb[0].mxu0
        %v916 = vadd.f32 %v692, %v915
        %917 = vmatprep.mubr.bf16.mxu0 %v626
        %918 = vmatmul.mubr.bf16.gmra.mrb[0].mxu0 %v625
        %v919 = vpop.f32.mrb[0].mxu0
        %v920 = vadd.f32 %v688, %v919
        %v921 = vpop.f32.mrb[0].mxu0
        %v922 = vadd.f32 %v692, %v921
        %v923 = vpop.f32.mrb[0].mxu0
        %v924 = vadd.f32 %v688, %v923
        %v925 = vpop.f32.mrb[0].mxu0
        %v926 = vadd.f32 %v692, %v925
        %927 = vmatprep.mubr.bf16.mxu0 %v628
        %928 = vmatmul.mubr.bf16.gmra.mrb[0].mxu0 %v627
        %v929 = vpop.f32.mrb[0].mxu0
        %v930 = vadd.f32 %v688, %v929
        %v931 = vpop.f32.mrb[0].mxu0
        %v932 = vadd.f32 %v692, %v931
        %v933 = vpop.f32.mrb[0].mxu0
        %v934 = vadd.f32 %v688, %v933
        %v935 = vpop.f32.mrb[0].mxu0
        %v936 = vadd.f32 %v692, %v935
        %937 = vmatprep.mubr.bf16.mxu0 %v630
        %938 = vmatmul.mubr.bf16.gmra.mrb[0].mxu0 %v629
        %v939 = vpop.f32.mrb[0].mxu0
        %v940 = vadd.f32 %v688, %v939
        %v941 = vpop.f32.mrb[0].mxu0
        %v942 = vadd.f32 %v692, %v941
        %v943 = vpop.f32.mrb[0].mxu0
        %v944 = vadd.f32 %v688, %v943
        %v945 = vpop.f32.mrb[0].mxu0
        %v946 = vadd.f32 %v692, %v945
        %947 = vmatprep.mubr.bf16.mxu0 %v632
        %948 = vmatmul.mubr.bf16.gmra.mrb[0].mxu0 %v631
        %v949 = vpop.f32.mrb[0].mxu0
        %v950 = vadd.f32 %v688, %v949
        %v951 = vpop.f32.mrb[0].mxu0
        %v952 = vadd.f32 %v692, %v951
        %v953 = vpop.f32.mrb[0].mxu0
        %v954 = vadd.f32 %v688, %v953
        %v955 = vpop.f32.mrb[0].mxu0
        %v956 = vadd.f32 %v692, %v955
        %957 = vmatprep.mubr.bf16.mxu0 %v634
        %958 = vmatmul.mubr.bf16.gmra.mrb[0].mxu0 %v633
        %v959 = vpop.f32.mrb[0].mxu0
        %v960 = vadd.f32 %v688, %v959
        %v961 = vpop.f32.mrb[0].mxu0
        %v962 = vadd.f32 %v692, %v961
        %v963 = vpop.f32.mrb[0].mxu0
        %v964 = vadd.f32 %v688, %v963
        %v965 = vpop.f32.mrb[0].mxu0
        %v966 = vadd.f32 %v692, %v965
        %967 = vmatprep.mubr.bf16.mxu0 %v636
        %968 = vmatmul.mubr.bf16.gmra.mrb[0].mxu0 %v635
        %v969 = vpop.f32.mrb[0].mxu0
        %v970 = vadd.f32 %v688, %v969
        %v971 = vpop.f32.mrb[0].mxu0
        %v972 = vadd.f32 %v692, %v971
        %v973 = vpop.f32.mrb[0].mxu0
        %v974 = vadd.f32 %v688, %v973
        %v975 = vpop.f32.mrb[0].mxu0
        %v976 = vadd.f32 %v692, %v975
        %977 = vmatprep.mubr.bf16.mxu0 %v638
        %978 = vmatmul.mubr.bf16.gmra.mrb[0].mxu0 %v637
        %v979 = vpop.f32.mrb[0].mxu0
        %v980 = vadd.f32 %v688, %v979
        %v981 = vpop.f32.mrb[0].mxu0
        %v982 = vadd.f32 %v692, %v981
        %v983 = vpop.f32.mrb[0].mxu0
        %v984 = vadd.f32 %v688, %v983
        %v985 = vpop.f32.mrb[0].mxu0
        %v986 = vadd.f32 %v692, %v985
        %987 = vmatprep.mubr.bf16.mxu0 %v640
        %988 = vmatmul.mubr.bf16.gmra.mrb[0].mxu0 %v639
        %v989 = vpop.f32.mrb[0].mxu0
        %v990 = vadd.f32 %v688, %v989
        %v991 = vpop.f32.mrb[0].mxu0
        %v992 = vadd.f32 %v692, %v991
        %v993 = vpop.f32.mrb[0].mxu0
        %v994 = vadd.f32 %v688, %v993
        %v995 = vpop.f32.mrb[0].mxu0
        %v996 = vadd.f32 %v692, %v995
        %997 = vmatprep.mubr.bf16.mxu0 %v642
        %998 = vmatmul.mubr.bf16.gmra.mrb[0].mxu0 %v641
        %v999 = vpop.f32.mrb[0].mxu0
        %v1000 = vadd.f32 %v688, %v999
        %v1001 = vpop.f32.mrb[0].mxu0
        %v1002 = vadd.f32 %v692, %v1001
        %v1003 = vpop.f32.mrb[0].mxu0
        %v1004 = vadd.f32 %v688, %v1003
        %v1005 = vpop.f32.mrb[0].mxu0
        %v1006 = vadd.f32 %v692, %v1005
        %1007 = vmatprep.mubr.bf16.mxu0 %v644
        %1008 = vmatmul.mubr.bf16.gmra.mrb[0].mxu0 %v643
        %v1009 = vpop.f32.mrb[0].mxu0
        %v1010 = vadd.f32 %v688, %v1009
        %v1011 = vpop.f32.mrb[0].mxu0
        %v1012 = vadd.f32 %v692, %v1011
        %v1013 = vpop.f32.mrb[0].mxu0
        %v1014 = vadd.f32 %v688, %v1013
        %v1015 = vpop.f32.mrb[0].mxu0
        %v1016 = vadd.f32 %v692, %v1015
        %1017 = vmatprep.mubr.bf16.mxu0 %v646
        %1018 = vmatmul.mubr.bf16.gmra.mrb[0].mxu0 %v645
        %v1019 = vpop.f32.mrb[0].mxu0
        %v1020 = vadd.f32 %v688, %v1019
        %v1021 = vpop.f32.mrb[0].mxu0
        %v1022 = vadd.f32 %v692, %v1021
        %v1023 = vpop.f32.mrb[0].mxu0
        %v1024 = vadd.f32 %v688, %v1023
        %v1025 = vpop.f32.mrb[0].mxu0
        %v1026 = vadd.f32 %v692, %v1025
        %1027 = vmatprep.mubr.bf16.mxu0 %v648
        %1028 = vmatmul.mubr.bf16.gmra.mrb[0].mxu0 %v647
        %v1029 = vpop.f32.mrb[0].mxu0
        %v1030 = vadd.f32 %v688, %v1029
        %v1031 = vpop.f32.mrb[0].mxu0
        %v1032 = vadd.f32 %v692, %v1031
        %v1033 = vpop.f32.mrb[0].mxu0
        %v1034 = vadd.f32 %v688, %v1033
        %v1035 = vpop.f32.mrb[0].mxu0
        %v1036 = vadd.f32 %v692, %v1035
        %1037 = vmatprep.mubr.bf16.mxu0 %v650
        %1038 = vmatmul.mubr.bf16.gmra.mrb[0].mxu0 %v649
        %v1039 = vpop.f32.mrb[0].mxu0
        %v1040 = vadd.f32 %v688, %v1039
        %v1041 = vpop.f32.mrb[0].mxu0
        %v1042 = vadd.f32 %v692, %v1041
        %v1043 = vpop.f32.mrb[0].mxu0
        %v1044 = vadd.f32 %v688, %v1043
        %v1045 = vpop.f32.mrb[0].mxu0
        %v1046 = vadd.f32 %v692, %v1045
        %1047 = vdwg.mxu0
        %v1048 = vmax.f32 %v890, 0.0
        %v1049 = vmax.f32 %v892, 0.0
        %v1050 = vmax.f32 %v894, 0.0
        %v1051 = vmax.f32 %v896, 0.0
        %v1052 = vmax.f32 %v900, 0.0
        %v1053 = vmax.f32 %v902, 0.0
        %v1054 = vmax.f32 %v904, 0.0
        %v1055 = vmax.f32 %v906, 0.0
        %v1056 = vmax.f32 %v910, 0.0
        %v1057 = vmax.f32 %v912, 0.0
        %v1058 = vmax.f32 %v914, 0.0
        %v1059 = vmax.f32 %v916, 0.0
        %v1060 = vmax.f32 %v920, 0.0
        %v1061 = vmax.f32 %v922, 0.0
        %v1062 = vmax.f32 %v924, 0.0
        %v1063 = vmax.f32 %v926, 0.0
        %v1064 = vmax.f32 %v930, 0.0
        %v1065 = vmax.f32 %v932, 0.0
        %v1066 = vmax.f32 %v934, 0.0
        %v1067 = vmax.f32 %v936, 0.0
        %v1068 = vmax.f32 %v940, 0.0
        %v1069 = vmax.f32 %v942, 0.0
        %v1070 = vmax.f32 %v944, 0.0
        %v1071 = vmax.f32 %v946, 0.0
        %v1072 = vmax.f32 %v950, 0.0
        %v1073 = vmax.f32 %v952, 0.0
        %v1074 = vmax.f32 %v954, 0.0
        %v1075 = vmax.f32 %v956, 0.0
        %v1076 = vmax.f32 %v960, 0.0
        %v1077 = vmax.f32 %v962, 0.0
        %v1078 = vmax.f32 %v964, 0.0
        %v1079 = vmax.f32 %v966, 0.0
        %v1080 = vmax.f32 %v970, 0.0
        %v1081 = vmax.f32 %v972, 0.0
        %v1082 = vmax.f32 %v974, 0.0
        %v1083 = vmax.f32 %v976, 0.0
        %v1084 = vmax.f32 %v980, 0.0
        %v1085 = vmax.f32 %v982, 0.0
        %v1086 = vmax.f32 %v984, 0.0
        %v1087 = vmax.f32 %v986, 0.0
        %v1088 = vmax.f32 %v990, 0.0
        %v1089 = vmax.f32 %v992, 0.0
        %v1090 = vmax.f32 %v994, 0.0
        %v1091 = vmax.f32 %v996, 0.0
        %v1092 = vmax.f32 %v1000, 0.0
        %v1093 = vmax.f32 %v1002, 0.0
        %v1094 = vmax.f32 %v1004, 0.0
        %v1095 = vmax.f32 %v1006, 0.0
        %v1096 = vmax.f32 %v1010, 0.0
        %v1097 = vmax.f32 %v1012, 0.0
        %v1098 = vmax.f32 %v1014, 0.0
        %v1099 = vmax.f32 %v1016, 0.0
        %v1100 = vmax.f32 %v1020, 0.0
        %v1101 = vmax.f32 %v1022, 0.0
        %v1102 = vmax.f32 %v1024, 0.0
        %v1103 = vmax.f32 %v1026, 0.0
        %v1104 = vmax.f32 %v1030, 0.0
        %v1105 = vmax.f32 %v1032, 0.0
        %v1106 = vmax.f32 %v1034, 0.0
        %v1107 = vmax.f32 %v1036, 0.0
        %v1108 = vmax.f32 %v1040, 0.0
        %v1109 = vmax.f32 %v1042, 0.0
        %v1110 = vmax.f32 %v1044, 0.0
        %v1111 = vmax.f32 %v1046, 0.0
        %v1112 = vpack.c.bf16 %v1050, %v1048
        %v1113 = vpack.c.bf16 %v1051, %v1049
        %v1114 = vpack.c.bf16 %v1054, %v1052
        %v1115 = vpack.c.bf16 %v1055, %v1053
        %v1116 = vpack.c.bf16 %v1058, %v1056
        %v1117 = vpack.c.bf16 %v1059, %v1057
        %v1118 = vpack.c.bf16 %v1062, %v1060
        %v1119 = vpack.c.bf16 %v1063, %v1061
        %v1120 = vpack.c.bf16 %v1066, %v1064
        %v1121 = vpack.c.bf16 %v1067, %v1065
        %v1122 = vpack.c.bf16 %v1070, %v1068
        %v1123 = vpack.c.bf16 %v1071, %v1069
        %v1124 = vpack.c.bf16 %v1074, %v1072
        %v1125 = vpack.c.bf16 %v1075, %v1073
        %v1126 = vpack.c.bf16 %v1078, %v1076
        %v1127 = vpack.c.bf16 %v1079, %v1077
        %v1128 = vpack.c.bf16 %v1082, %v1080
        %v1129 = vpack.c.bf16 %v1083, %v1081
        %v1130 = vpack.c.bf16 %v1086, %v1084
        %v1131 = vpack.c.bf16 %v1087, %v1085
        %v1132 = vpack.c.bf16 %v1090, %v1088
        %v1133 = vpack.c.bf16 %v1091, %v1089
        %v1134 = vpack.c.bf16 %v1094, %v1092
        %v1135 = vpack.c.bf16 %v1095, %v1093
        %v1136 = vpack.c.bf16 %v1098, %v1096
        %v1137 = vpack.c.bf16 %v1099, %v1097
        %v1138 = vpack.c.bf16 %v1102, %v1100
        %v1139 = vpack.c.bf16 %v1103, %v1101
        %v1140 = vpack.c.bf16 %v1106, %v1104
        %v1141 = vpack.c.bf16 %v1107, %v1105
        %v1142 = vpack.c.bf16 %v1110, %v1108
        %v1143 = vpack.c.bf16 %v1111, %v1109
        %v1144 = vld [vmem:[#allocation8] sm:$0xff]
        %v1145 = vld [vmem:[#allocation8 + $0x8] sm:$0xff]
        %v1146 = vld [vmem:[#allocation8 + $0x10] sm:$0xff]
        %v1147 = vld [vmem:[#allocation8 + $0x18] sm:$0xff]
        %v1148 = vld [vmem:[#allocation8 + $0x20] sm:$0xff]
        %v1149 = vld [vmem:[#allocation8 + $0x28] sm:$0xff]
        %v1150 = vld [vmem:[#allocation8 + $0x30] sm:$0xff]
        %v1151 = vld [vmem:[#allocation8 + $0x38] sm:$0xff]
        %v1152 = vld [vmem:[#allocation8 + $0x40] sm:$0xff]
        %v1153 = vld [vmem:[#allocation8 + $0x48] sm:$0xff]
        %v1154 = vld [vmem:[#allocation8 + $0x50] sm:$0xff]
        %v1155 = vld [vmem:[#allocation8 + $0x58] sm:$0xff]
        %v1156 = vld [vmem:[#allocation8 + $0x60] sm:$0xff]
        %v1157 = vld [vmem:[#allocation8 + $0x68] sm:$0xff]
        %v1158 = vld [vmem:[#allocation8 + $0x70] sm:$0xff]
        %v1159 = vld [vmem:[#allocation8 + $0x78] sm:$0xff]
        %v1160 = vld [vmem:[#allocation8 + $0x80] sm:$0xff]
        %v1161 = vld [vmem:[#allocation8 + $0x88] sm:$0xff]
        %v1162 = vld [vmem:[#allocation8 + $0x90] sm:$0xff]
        %v1163 = vld [vmem:[#allocation8 + $0x98] sm:$0xff]
        %v1164 = vld [vmem:[#allocation8 + $0xa0] sm:$0xff]
        %v1165 = vld [vmem:[#allocation8 + $0xa8] sm:$0xff]
        %v1166 = vld [vmem:[#allocation8 + $0xb0] sm:$0xff]
        %v1167 = vld [vmem:[#allocation8 + $0xb8] sm:$0xff]
        %v1168 = vld [vmem:[#allocation8 + $0xc0] sm:$0xff]
        %v1169 = vld [vmem:[#allocation8 + $0xc8] sm:$0xff]
        %v1170 = vld [vmem:[#allocation8 + $0xd0] sm:$0xff]
        %v1171 = vld [vmem:[#allocation8 + $0xd8] sm:$0xff]
        %v1172 = vld [vmem:[#allocation8 + $0xe0] sm:$0xff]
        %v1173 = vld [vmem:[#allocation8 + $0xe8] sm:$0xff]
        %v1174 = vld [vmem:[#allocation8 + $0xf0] sm:$0xff]
        %v1175 = vld [vmem:[#allocation8 + $0xf8] sm:$0xff]
        %v1176 = vld [vmem:[%s5] sm:$0x3]
        %v1178 = vlaneseq
        %v1179 = vshrl.u32 %v1178, 7
        %v1180 = vsub.s32 0, %v1179
        %v1181 = vrot.slane %v1176, %v1180
        %v1182 = vlaneseq
        %v1183 = vshrl.u32 %v1182, 7
        %v1184 = vsub.s32 1, %v1183
        %v1185 = vrot.slane %v1176, %v1184
        %v1220 = vunpack.c.l.b16 %v1144
        %v1221 = vunpack.c.h.b16 %v1144
        %v1222 = vunpack.c.l.b16 %v1145
        %v1223 = vunpack.c.h.b16 %v1145
        %v1224 = vunpack.c.l.b16 %v1146
        %v1225 = vunpack.c.h.b16 %v1146
        %v1226 = vunpack.c.l.b16 %v1147
        %v1227 = vunpack.c.h.b16 %v1147
        %v1228 = vunpack.c.l.b16 %v1148
        %v1229 = vunpack.c.h.b16 %v1148
        %v1230 = vunpack.c.l.b16 %v1149
        %v1231 = vunpack.c.h.b16 %v1149
        %v1232 = vunpack.c.l.b16 %v1150
        %v1233 = vunpack.c.h.b16 %v1150
        %v1234 = vunpack.c.l.b16 %v1151
        %v1235 = vunpack.c.h.b16 %v1151
        %v1236 = vunpack.c.l.b16 %v1152
        %v1237 = vunpack.c.h.b16 %v1152
        %v1238 = vunpack.c.l.b16 %v1153
        %v1239 = vunpack.c.h.b16 %v1153
        %v1240 = vunpack.c.l.b16 %v1154
        %v1241 = vunpack.c.h.b16 %v1154
        %v1242 = vunpack.c.l.b16 %v1155
        %v1243 = vunpack.c.h.b16 %v1155
        %v1244 = vunpack.c.l.b16 %v1156
        %v1245 = vunpack.c.h.b16 %v1156
        %v1246 = vunpack.c.l.b16 %v1157
        %v1247 = vunpack.c.h.b16 %v1157
        %v1248 = vunpack.c.l.b16 %v1158
        %v1249 = vunpack.c.h.b16 %v1158
        %v1250 = vunpack.c.l.b16 %v1159
        %v1251 = vunpack.c.h.b16 %v1159
        %v1252 = vunpack.c.l.b16 %v1160
        %v1253 = vunpack.c.h.b16 %v1160
        %v1254 = vunpack.c.l.b16 %v1161
        %v1255 = vunpack.c.h.b16 %v1161
        %v1256 = vunpack.c.l.b16 %v1162
        %v1257 = vunpack.c.h.b16 %v1162
        %v1258 = vunpack.c.l.b16 %v1163
        %v1259 = vunpack.c.h.b16 %v1163
        %v1260 = vunpack.c.l.b16 %v1164
        %v1261 = vunpack.c.h.b16 %v1164
        %v1262 = vunpack.c.l.b16 %v1165
        %v1263 = vunpack.c.h.b16 %v1165
        %v1264 = vunpack.c.l.b16 %v1166
        %v1265 = vunpack.c.h.b16 %v1166
        %v1266 = vunpack.c.l.b16 %v1167
        %v1267 = vunpack.c.h.b16 %v1167
        %v1268 = vunpack.c.l.b16 %v1168
        %v1269 = vunpack.c.h.b16 %v1168
        %v1270 = vunpack.c.l.b16 %v1169
        %v1271 = vunpack.c.h.b16 %v1169
        %v1272 = vunpack.c.l.b16 %v1170
        %v1273 = vunpack.c.h.b16 %v1170
        %v1274 = vunpack.c.l.b16 %v1171
        %v1275 = vunpack.c.h.b16 %v1171
        %v1276 = vunpack.c.l.b16 %v1172
        %v1277 = vunpack.c.h.b16 %v1172
        %v1278 = vunpack.c.l.b16 %v1173
        %v1279 = vunpack.c.h.b16 %v1173
        %v1280 = vunpack.c.l.b16 %v1174
        %v1281 = vunpack.c.h.b16 %v1174
        %v1282 = vunpack.c.l.b16 %v1175
        %v1283 = vunpack.c.h.b16 %v1175
        %v1284 = vpack.c.b16 %v1222, %v1220
        %v1285 = vpack.c.b16 %v1223, %v1221
        %v1286 = vpack.c.b16 %v1226, %v1224
        %v1287 = vpack.c.b16 %v1227, %v1225
        %v1288 = vpack.c.b16 %v1230, %v1228
        %v1289 = vpack.c.b16 %v1231, %v1229
        %v1290 = vpack.c.b16 %v1234, %v1232
        %v1291 = vpack.c.b16 %v1235, %v1233
        %v1292 = vpack.c.b16 %v1238, %v1236
        %v1293 = vpack.c.b16 %v1239, %v1237
        %v1294 = vpack.c.b16 %v1242, %v1240
        %v1295 = vpack.c.b16 %v1243, %v1241
        %v1296 = vpack.c.b16 %v1246, %v1244
        %v1297 = vpack.c.b16 %v1247, %v1245
        %v1298 = vpack.c.b16 %v1250, %v1248
        %v1299 = vpack.c.b16 %v1251, %v1249
        %v1300 = vpack.c.b16 %v1254, %v1252
        %v1301 = vpack.c.b16 %v1255, %v1253
        %v1302 = vpack.c.b16 %v1258, %v1256
        %v1303 = vpack.c.b16 %v1259, %v1257
        %v1304 = vpack.c.b16 %v1262, %v1260
        %v1305 = vpack.c.b16 %v1263, %v1261
        %v1306 = vpack.c.b16 %v1266, %v1264
        %v1307 = vpack.c.b16 %v1267, %v1265
        %v1308 = vpack.c.b16 %v1270, %v1268
        %v1309 = vpack.c.b16 %v1271, %v1269
        %v1310 = vpack.c.b16 %v1274, %v1272
        %v1311 = vpack.c.b16 %v1275, %v1273
        %v1312 = vpack.c.b16 %v1278, %v1276
        %v1313 = vpack.c.b16 %v1279, %v1277
        %v1314 = vpack.c.b16 %v1282, %v1280
        %v1315 = vpack.c.b16 %v1283, %v1281
        %1348 = vmatprep.subr.bf16.mxu0 %v1285
        %1349 = vmatpush1.bf16.msra.mxu0 %v1284
        %1350 = vmatprep.subr.bf16.mxu0 %v1287
        %1351 = vmatpush1.bf16.msra.mxu0 %v1286
        %1352 = vmatprep.subr.bf16.mxu0 %v1289
        %1353 = vmatpush1.bf16.msra.mxu0 %v1288
        %1354 = vmatprep.subr.bf16.mxu0 %v1291
        %1355 = vmatpush1.bf16.msra.mxu0 %v1290
        %1356 = vmatprep.subr.bf16.mxu0 %v1293
        %1357 = vmatpush1.bf16.msra.mxu0 %v1292
        %1358 = vmatprep.subr.bf16.mxu0 %v1295
        %1359 = vmatpush1.bf16.msra.mxu0 %v1294
        %1360 = vmatprep.subr.bf16.mxu0 %v1297
        %1361 = vmatpush1.bf16.msra.mxu0 %v1296
        %1362 = vmatprep.subr.bf16.mxu0 %v1299
        %1363 = vmatpush1.bf16.msra.mxu0 %v1298
        %1364 = vmatprep.subr.bf16.mxu0 %v1301
        %1365 = vmatpush1.bf16.msra.mxu0 %v1300
        %1366 = vmatprep.subr.bf16.mxu0 %v1303
        %1367 = vmatpush1.bf16.msra.mxu0 %v1302
        %1368 = vmatprep.subr.bf16.mxu0 %v1305
        %1369 = vmatpush1.bf16.msra.mxu0 %v1304
        %1370 = vmatprep.subr.bf16.mxu0 %v1307
        %1371 = vmatpush1.bf16.msra.mxu0 %v1306
        %1372 = vmatprep.subr.bf16.mxu0 %v1309
        %1373 = vmatpush1.bf16.msra.mxu0 %v1308
        %1374 = vmatprep.subr.bf16.mxu0 %v1311
        %1375 = vmatpush1.bf16.msra.mxu0 %v1310
        %1376 = vmatprep.subr.bf16.mxu0 %v1313
        %1377 = vmatpush1.bf16.msra.mxu0 %v1312
        %1378 = vmatprep.subr.bf16.mxu0 %v1315
        %1379 = vmatpush1.bf16.msra.mxu0 %v1314
        %1380 = vmatprep.mubr.bf16.mxu0 %v1113
        %1381 = vmatmul.mubr.bf16.gmra.mrb[0].mxu0 %v1112
        %v1382 = vpop.f32.mrb[0].mxu0
        %v1383 = vadd.f32 %v1181, %v1382
        %v1384 = vpop.f32.mrb[0].mxu0
        %v1385 = vadd.f32 %v1185, %v1384
        %v1386 = vpop.f32.mrb[0].mxu0
        %v1387 = vadd.f32 %v1181, %v1386
        %v1388 = vpop.f32.mrb[0].mxu0
        %v1389 = vadd.f32 %v1185, %v1388
        %1390 = vmatprep.mubr.bf16.mxu0 %v1115
        %1391 = vmatmul.mubr.bf16.gmra.mrb[0].mxu0 %v1114
        %v1392 = vpop.f32.mrb[0].mxu0
        %v1393 = vadd.f32 %v1181, %v1392
        %v1394 = vpop.f32.mrb[0].mxu0
        %v1395 = vadd.f32 %v1185, %v1394
        %v1396 = vpop.f32.mrb[0].mxu0
        %v1397 = vadd.f32 %v1181, %v1396
        %v1398 = vpop.f32.mrb[0].mxu0
        %v1399 = vadd.f32 %v1185, %v1398
        %1400 = vmatprep.mubr.bf16.mxu0 %v1117
        %1401 = vmatmul.mubr.bf16.gmra.mrb[0].mxu0 %v1116
        %v1402 = vpop.f32.mrb[0].mxu0
        %v1403 = vadd.f32 %v1181, %v1402
        %v1404 = vpop.f32.mrb[0].mxu0
        %v1405 = vadd.f32 %v1185, %v1404
        %v1406 = vpop.f32.mrb[0].mxu0
        %v1407 = vadd.f32 %v1181, %v1406
        %v1408 = vpop.f32.mrb[0].mxu0
        %v1409 = vadd.f32 %v1185, %v1408
        %1410 = vmatprep.mubr.bf16.mxu0 %v1119
        %1411 = vmatmul.mubr.bf16.gmra.mrb[0].mxu0 %v1118
        %v1412 = vpop.f32.mrb[0].mxu0
        %v1413 = vadd.f32 %v1181, %v1412
        %v1414 = vpop.f32.mrb[0].mxu0
        %v1415 = vadd.f32 %v1185, %v1414
        %v1416 = vpop.f32.mrb[0].mxu0
        %v1417 = vadd.f32 %v1181, %v1416
        %v1418 = vpop.f32.mrb[0].mxu0
        %v1419 = vadd.f32 %v1185, %v1418
        %1420 = vmatprep.mubr.bf16.mxu0 %v1121
        %1421 = vmatmul.mubr.bf16.gmra.mrb[0].mxu0 %v1120
        %v1422 = vpop.f32.mrb[0].mxu0
        %v1423 = vadd.f32 %v1181, %v1422
        %v1424 = vpop.f32.mrb[0].mxu0
        %v1425 = vadd.f32 %v1185, %v1424
        %v1426 = vpop.f32.mrb[0].mxu0
        %v1427 = vadd.f32 %v1181, %v1426
        %v1428 = vpop.f32.mrb[0].mxu0
        %v1429 = vadd.f32 %v1185, %v1428
        %1430 = vmatprep.mubr.bf16.mxu0 %v1123
        %1431 = vmatmul.mubr.bf16.gmra.mrb[0].mxu0 %v1122
        %v1432 = vpop.f32.mrb[0].mxu0
        %v1433 = vadd.f32 %v1181, %v1432
        %v1434 = vpop.f32.mrb[0].mxu0
        %v1435 = vadd.f32 %v1185, %v1434
        %v1436 = vpop.f32.mrb[0].mxu0
        %v1437 = vadd.f32 %v1181, %v1436
        %v1438 = vpop.f32.mrb[0].mxu0
        %v1439 = vadd.f32 %v1185, %v1438
        %1440 = vmatprep.mubr.bf16.mxu0 %v1125
        %1441 = vmatmul.mubr.bf16.gmra.mrb[0].mxu0 %v1124
        %v1442 = vpop.f32.mrb[0].mxu0
        %v1443 = vadd.f32 %v1181, %v1442
        %v1444 = vpop.f32.mrb[0].mxu0
        %v1445 = vadd.f32 %v1185, %v1444
        %v1446 = vpop.f32.mrb[0].mxu0
        %v1447 = vadd.f32 %v1181, %v1446
        %v1448 = vpop.f32.mrb[0].mxu0
        %v1449 = vadd.f32 %v1185, %v1448
        %1450 = vmatprep.mubr.bf16.mxu0 %v1127
        %1451 = vmatmul.mubr.bf16.gmra.mrb[0].mxu0 %v1126
        %v1452 = vpop.f32.mrb[0].mxu0
        %v1453 = vadd.f32 %v1181, %v1452
        %v1454 = vpop.f32.mrb[0].mxu0
        %v1455 = vadd.f32 %v1185, %v1454
        %v1456 = vpop.f32.mrb[0].mxu0
        %v1457 = vadd.f32 %v1181, %v1456
        %v1458 = vpop.f32.mrb[0].mxu0
        %v1459 = vadd.f32 %v1185, %v1458
        %1460 = vmatprep.mubr.bf16.mxu0 %v1129
        %1461 = vmatmul.mubr.bf16.gmra.mrb[0].mxu0 %v1128
        %v1462 = vpop.f32.mrb[0].mxu0
        %v1463 = vadd.f32 %v1181, %v1462
        %v1464 = vpop.f32.mrb[0].mxu0
        %v1465 = vadd.f32 %v1185, %v1464
        %v1466 = vpop.f32.mrb[0].mxu0
        %v1467 = vadd.f32 %v1181, %v1466
        %v1468 = vpop.f32.mrb[0].mxu0
        %v1469 = vadd.f32 %v1185, %v1468
        %1470 = vmatprep.mubr.bf16.mxu0 %v1131
        %1471 = vmatmul.mubr.bf16.gmra.mrb[0].mxu0 %v1130
        %v1472 = vpop.f32.mrb[0].mxu0
        %v1473 = vadd.f32 %v1181, %v1472
        %v1474 = vpop.f32.mrb[0].mxu0
        %v1475 = vadd.f32 %v1185, %v1474
        %v1476 = vpop.f32.mrb[0].mxu0
        %v1477 = vadd.f32 %v1181, %v1476
        %v1478 = vpop.f32.mrb[0].mxu0
        %v1479 = vadd.f32 %v1185, %v1478
        %1480 = vmatprep.mubr.bf16.mxu0 %v1133
        %1481 = vmatmul.mubr.bf16.gmra.mrb[0].mxu0 %v1132
        %v1482 = vpop.f32.mrb[0].mxu0
        %v1483 = vadd.f32 %v1181, %v1482
        %v1484 = vpop.f32.mrb[0].mxu0
        %v1485 = vadd.f32 %v1185, %v1484
        %v1486 = vpop.f32.mrb[0].mxu0
        %v1487 = vadd.f32 %v1181, %v1486
        %v1488 = vpop.f32.mrb[0].mxu0
        %v1489 = vadd.f32 %v1185, %v1488
        %1490 = vmatprep.mubr.bf16.mxu0 %v1135
        %1491 = vmatmul.mubr.bf16.gmra.mrb[0].mxu0 %v1134
        %v1492 = vpop.f32.mrb[0].mxu0
        %v1493 = vadd.f32 %v1181, %v1492
        %v1494 = vpop.f32.mrb[0].mxu0
        %v1495 = vadd.f32 %v1185, %v1494
        %v1496 = vpop.f32.mrb[0].mxu0
        %v1497 = vadd.f32 %v1181, %v1496
        %v1498 = vpop.f32.mrb[0].mxu0
        %v1499 = vadd.f32 %v1185, %v1498
        %1500 = vmatprep.mubr.bf16.mxu0 %v1137
        %1501 = vmatmul.mubr.bf16.gmra.mrb[0].mxu0 %v1136
        %v1502 = vpop.f32.mrb[0].mxu0
        %v1503 = vadd.f32 %v1181, %v1502
        %v1504 = vpop.f32.mrb[0].mxu0
        %v1505 = vadd.f32 %v1185, %v1504
        %v1506 = vpop.f32.mrb[0].mxu0
        %v1507 = vadd.f32 %v1181, %v1506
        %v1508 = vpop.f32.mrb[0].mxu0
        %v1509 = vadd.f32 %v1185, %v1508
        %1510 = vmatprep.mubr.bf16.mxu0 %v1139
        %1511 = vmatmul.mubr.bf16.gmra.mrb[0].mxu0 %v1138
        %v1512 = vpop.f32.mrb[0].mxu0
        %v1513 = vadd.f32 %v1181, %v1512
        %v1514 = vpop.f32.mrb[0].mxu0
        %v1515 = vadd.f32 %v1185, %v1514
        %v1516 = vpop.f32.mrb[0].mxu0
        %v1517 = vadd.f32 %v1181, %v1516
        %v1518 = vpop.f32.mrb[0].mxu0
        %v1519 = vadd.f32 %v1185, %v1518
        %1520 = vmatprep.mubr.bf16.mxu0 %v1141
        %1521 = vmatmul.mubr.bf16.gmra.mrb[0].mxu0 %v1140
        %v1522 = vpop.f32.mrb[0].mxu0
        %v1523 = vadd.f32 %v1181, %v1522
        %v1524 = vpop.f32.mrb[0].mxu0
        %v1525 = vadd.f32 %v1185, %v1524
        %v1526 = vpop.f32.mrb[0].mxu0
        %v1527 = vadd.f32 %v1181, %v1526
        %v1528 = vpop.f32.mrb[0].mxu0
        %v1529 = vadd.f32 %v1185, %v1528
        %1530 = vmatprep.mubr.bf16.mxu0 %v1143
        %1531 = vmatmul.mubr.bf16.gmra.mrb[0].mxu0 %v1142
        %v1532 = vpop.f32.mrb[0].mxu0
        %v1533 = vadd.f32 %v1181, %v1532
        %v1534 = vpop.f32.mrb[0].mxu0
        %v1535 = vadd.f32 %v1185, %v1534
        %v1536 = vpop.f32.mrb[0].mxu0
        %v1537 = vadd.f32 %v1181, %v1536
        %v1538 = vpop.f32.mrb[0].mxu0
        %v1539 = vadd.f32 %v1185, %v1538
        %1540 = vdwg.mxu0
        %v1541 = vld [vmem:[%s477] sm:$0xff]
        %v1542 = vld [vmem:[%s477 + $0x8] sm:$0xff]
        %v1543 = vld [vmem:[%s477 + $0x10] sm:$0xff]
        %v1544 = vld [vmem:[%s477 + $0x18] sm:$0xff]
        %v1545 = vld [vmem:[%s477 + $0x20] sm:$0xff]
        %v1546 = vld [vmem:[%s477 + $0x28] sm:$0xff]
        %v1547 = vld [vmem:[%s477 + $0x30] sm:$0xff]
        %v1548 = vld [vmem:[%s477 + $0x38] sm:$0xff]
        %v1549 = vld [vmem:[%s477 + $0x40] sm:$0xff]
        %v1550 = vld [vmem:[%s477 + $0x48] sm:$0xff]
        %v1551 = vld [vmem:[%s477 + $0x50] sm:$0xff]
        %v1552 = vld [vmem:[%s477 + $0x58] sm:$0xff]
        %v1553 = vld [vmem:[%s477 + $0x60] sm:$0xff]
        %v1554 = vld [vmem:[%s477 + $0x68] sm:$0xff]
        %v1555 = vld [vmem:[%s477 + $0x70] sm:$0xff]
        %v1556 = vld [vmem:[%s477 + $0x78] sm:$0xff]
        %v1557 = vld [vmem:[%s477 + $0x80] sm:$0xff]
        %v1558 = vld [vmem:[%s477 + $0x88] sm:$0xff]
        %v1559 = vld [vmem:[%s477 + $0x90] sm:$0xff]
        %v1560 = vld [vmem:[%s477 + $0x98] sm:$0xff]
        %v1561 = vld [vmem:[%s477 + $0xa0] sm:$0xff]
        %v1562 = vld [vmem:[%s477 + $0xa8] sm:$0xff]
        %v1563 = vld [vmem:[%s477 + $0xb0] sm:$0xff]
        %v1564 = vld [vmem:[%s477 + $0xb8] sm:$0xff]
        %v1565 = vld [vmem:[%s477 + $0xc0] sm:$0xff]
        %v1566 = vld [vmem:[%s477 + $0xc8] sm:$0xff]
        %v1567 = vld [vmem:[%s477 + $0xd0] sm:$0xff]
        %v1568 = vld [vmem:[%s477 + $0xd8] sm:$0xff]
        %v1569 = vld [vmem:[%s477 + $0xe0] sm:$0xff]
        %v1570 = vld [vmem:[%s477 + $0xe8] sm:$0xff]
        %v1571 = vld [vmem:[%s477 + $0xf0] sm:$0xff]
        %v1572 = vld [vmem:[%s477 + $0xf8] sm:$0xff]
        %v1573 = vmul.f32 %v1385, %v1541
        %v1574 = vmul.f32 %v1389, %v1542
        %v1575 = vmul.f32 %v1395, %v1543
        %v1576 = vmul.f32 %v1399, %v1544
        %v1577 = vmul.f32 %v1405, %v1545
        %v1578 = vmul.f32 %v1409, %v1546
        %v1579 = vmul.f32 %v1415, %v1547
        %v1580 = vmul.f32 %v1419, %v1548
        %v1581 = vmul.f32 %v1425, %v1549
        %v1582 = vmul.f32 %v1429, %v1550
        %v1583 = vmul.f32 %v1435, %v1551
        %v1584 = vmul.f32 %v1439, %v1552
        %v1585 = vmul.f32 %v1445, %v1553
        %v1586 = vmul.f32 %v1449, %v1554
        %v1587 = vmul.f32 %v1455, %v1555
        %v1588 = vmul.f32 %v1459, %v1556
        %v1589 = vmul.f32 %v1465, %v1557
        %v1590 = vmul.f32 %v1469, %v1558
        %v1591 = vmul.f32 %v1475, %v1559
        %v1592 = vmul.f32 %v1479, %v1560
        %v1593 = vmul.f32 %v1485, %v1561
        %v1594 = vmul.f32 %v1489, %v1562
        %v1595 = vmul.f32 %v1495, %v1563
        %v1596 = vmul.f32 %v1499, %v1564
        %v1597 = vmul.f32 %v1505, %v1565
        %v1598 = vmul.f32 %v1509, %v1566
        %v1599 = vmul.f32 %v1515, %v1567
        %v1600 = vmul.f32 %v1519, %v1568
        %v1601 = vmul.f32 %v1525, %v1569
        %v1602 = vmul.f32 %v1529, %v1570
        %v1603 = vmul.f32 %v1535, %v1571
        %v1604 = vmul.f32 %v1539, %v1572
        %v1605 = vadd.f32 %v1383, %v1573
        %v1606 = vadd.f32 %v1387, %v1574
        %v1607 = vadd.f32 %v1393, %v1575
        %v1608 = vadd.f32 %v1397, %v1576
        %v1609 = vadd.f32 %v1403, %v1577
        %v1610 = vadd.f32 %v1407, %v1578
        %v1611 = vadd.f32 %v1413, %v1579
        %v1612 = vadd.f32 %v1417, %v1580
        %v1613 = vadd.f32 %v1423, %v1581
        %v1614 = vadd.f32 %v1427, %v1582
        %v1615 = vadd.f32 %v1433, %v1583
        %v1616 = vadd.f32 %v1437, %v1584
        %v1617 = vadd.f32 %v1443, %v1585
        %v1618 = vadd.f32 %v1447, %v1586
        %v1619 = vadd.f32 %v1453, %v1587
        %v1620 = vadd.f32 %v1457, %v1588
        %v1621 = vadd.f32 %v1463, %v1589
        %v1622 = vadd.f32 %v1467, %v1590
        %v1623 = vadd.f32 %v1473, %v1591
        %v1624 = vadd.f32 %v1477, %v1592
        %v1625 = vadd.f32 %v1483, %v1593
        %v1626 = vadd.f32 %v1487, %v1594
        %v1627 = vadd.f32 %v1493, %v1595
        %v1628 = vadd.f32 %v1497, %v1596
        %v1629 = vadd.f32 %v1503, %v1597
        %v1630 = vadd.f32 %v1507, %v1598
        %v1631 = vadd.f32 %v1513, %v1599
        %v1632 = vadd.f32 %v1517, %v1600
        %v1633 = vadd.f32 %v1523, %v1601
        %v1634 = vadd.f32 %v1527, %v1602
        %v1635 = vadd.f32 %v1533, %v1603
        %v1636 = vadd.f32 %v1537, %v1604
        %v1637 = vpack.c.bf16 %v1606, %v1605
        %v1638 = vpack.c.bf16 %v1608, %v1607
        %v1639 = vpack.c.bf16 %v1610, %v1609
        %v1640 = vpack.c.bf16 %v1612, %v1611
        %v1641 = vpack.c.bf16 %v1614, %v1613
        %v1642 = vpack.c.bf16 %v1616, %v1615
        %v1643 = vpack.c.bf16 %v1618, %v1617
        %v1644 = vpack.c.bf16 %v1620, %v1619
        %v1645 = vpack.c.bf16 %v1622, %v1621
        %v1646 = vpack.c.bf16 %v1624, %v1623
        %v1647 = vpack.c.bf16 %v1626, %v1625
        %v1648 = vpack.c.bf16 %v1628, %v1627
        %v1649 = vpack.c.bf16 %v1630, %v1629
        %v1650 = vpack.c.bf16 %v1632, %v1631
        %v1651 = vpack.c.bf16 %v1634, %v1633
        %v1652 = vpack.c.bf16 %v1636, %v1635
        %v1653 = vld [vmem:[#allocation10] sm:$0xff]
        %v1654 = vld [vmem:[#allocation10 + $0x8] sm:$0xff]
        %v1655 = vld [vmem:[#allocation10 + $0x10] sm:$0xff]
        %v1656 = vld [vmem:[#allocation10 + $0x18] sm:$0xff]
        %v1657 = vld [vmem:[#allocation10 + $0x20] sm:$0xff]
        %v1658 = vld [vmem:[#allocation10 + $0x28] sm:$0xff]
        %v1659 = vld [vmem:[#allocation10 + $0x30] sm:$0xff]
        %v1660 = vld [vmem:[#allocation10 + $0x38] sm:$0xff]
        %v1661 = vld [vmem:[#allocation10 + $0x40] sm:$0xff]
        %v1662 = vld [vmem:[#allocation10 + $0x48] sm:$0xff]
        %v1663 = vld [vmem:[#allocation10 + $0x50] sm:$0xff]
        %v1664 = vld [vmem:[#allocation10 + $0x58] sm:$0xff]
        %v1665 = vld [vmem:[#allocation10 + $0x60] sm:$0xff]
        %v1666 = vld [vmem:[#allocation10 + $0x68] sm:$0xff]
        %v1667 = vld [vmem:[#allocation10 + $0x70] sm:$0xff]
        %v1668 = vld [vmem:[#allocation10 + $0x78] sm:$0xff]
        %v1669 = vld [vmem:[%s7] sm:$0x3]
        %v1671 = vlaneseq
        %v1672 = vshrl.u32 %v1671, 7
        %v1673 = vsub.s32 0, %v1672
        %v1674 = vrot.slane %v1669, %v1673
        %v1675 = vlaneseq
        %v1676 = vshrl.u32 %v1675, 7
        %v1677 = vsub.s32 1, %v1676
        %v1678 = vrot.slane %v1669, %v1677
        %v1697 = vunpack.c.l.b16 %v1653
        %v1698 = vunpack.c.h.b16 %v1653
        %v1699 = vunpack.c.l.b16 %v1654
        %v1700 = vunpack.c.h.b16 %v1654
        %v1701 = vunpack.c.l.b16 %v1655
        %v1702 = vunpack.c.h.b16 %v1655
        %v1703 = vunpack.c.l.b16 %v1656
        %v1704 = vunpack.c.h.b16 %v1656
        %v1705 = vunpack.c.l.b16 %v1657
        %v1706 = vunpack.c.h.b16 %v1657
        %v1707 = vunpack.c.l.b16 %v1658
        %v1708 = vunpack.c.h.b16 %v1658
        %v1709 = vunpack.c.l.b16 %v1659
        %v1710 = vunpack.c.h.b16 %v1659
        %v1711 = vunpack.c.l.b16 %v1660
        %v1712 = vunpack.c.h.b16 %v1660
        %v1713 = vunpack.c.l.b16 %v1661
        %v1714 = vunpack.c.h.b16 %v1661
        %v1715 = vunpack.c.l.b16 %v1662
        %v1716 = vunpack.c.h.b16 %v1662
        %v1717 = vunpack.c.l.b16 %v1663
        %v1718 = vunpack.c.h.b16 %v1663
        %v1719 = vunpack.c.l.b16 %v1664
        %v1720 = vunpack.c.h.b16 %v1664
        %v1721 = vunpack.c.l.b16 %v1665
        %v1722 = vunpack.c.h.b16 %v1665
        %v1723 = vunpack.c.l.b16 %v1666
        %v1724 = vunpack.c.h.b16 %v1666
        %v1725 = vunpack.c.l.b16 %v1667
        %v1726 = vunpack.c.h.b16 %v1667
        %v1727 = vunpack.c.l.b16 %v1668
        %v1728 = vunpack.c.h.b16 %v1668
        %v1729 = vpack.c.b16 %v1699, %v1697
        %v1730 = vpack.c.b16 %v1700, %v1698
        %v1731 = vpack.c.b16 %v1703, %v1701
        %v1732 = vpack.c.b16 %v1704, %v1702
        %v1733 = vpack.c.b16 %v1707, %v1705
        %v1734 = vpack.c.b16 %v1708, %v1706
        %v1735 = vpack.c.b16 %v1711, %v1709
        %v1736 = vpack.c.b16 %v1712, %v1710
        %v1737 = vpack.c.b16 %v1715, %v1713
        %v1738 = vpack.c.b16 %v1716, %v1714
        %v1739 = vpack.c.b16 %v1719, %v1717
        %v1740 = vpack.c.b16 %v1720, %v1718
        %v1741 = vpack.c.b16 %v1723, %v1721
        %v1742 = vpack.c.b16 %v1724, %v1722
        %v1743 = vpack.c.b16 %v1727, %v1725
        %v1744 = vpack.c.b16 %v1728, %v1726
        %1761 = vmatprep.subr.bf16.mxu0 %v1730
        %1762 = vmatpush1.bf16.msra.mxu0 %v1729
        %1763 = vmatprep.subr.bf16.mxu0 %v1732
        %1764 = vmatpush1.bf16.msra.mxu0 %v1731
        %1765 = vmatprep.subr.bf16.mxu0 %v1734
        %1766 = vmatpush1.bf16.msra.mxu0 %v1733
        %1767 = vmatprep.subr.bf16.mxu0 %v1736
        %1768 = vmatpush1.bf16.msra.mxu0 %v1735
        %1769 = vmatprep.subr.bf16.mxu0 %v1738
        %1770 = vmatpush1.bf16.msra.mxu0 %v1737
        %1771 = vmatprep.subr.bf16.mxu0 %v1740
        %1772 = vmatpush1.bf16.msra.mxu0 %v1739
        %1773 = vmatprep.subr.bf16.mxu0 %v1742
        %1774 = vmatpush1.bf16.msra.mxu0 %v1741
        %1775 = vmatprep.subr.bf16.mxu0 %v1744
        %1776 = vmatpush1.bf16.msra.mxu0 %v1743
        %1777 = vmatprep.subr.bf16.mxu0 0
        %1778 = vmatpush1.bf16.msra.mxu0 0
        %1779 = vmatprep.subr.bf16.mxu0 0
        %1780 = vmatpush1.bf16.msra.mxu0 0
        %1781 = vmatprep.subr.bf16.mxu0 0
        %1782 = vmatpush1.bf16.msra.mxu0 0
        %1783 = vmatprep.subr.bf16.mxu0 0
        %1784 = vmatpush1.bf16.msra.mxu0 0
        %1785 = vmatprep.subr.bf16.mxu0 0
        %1786 = vmatpush1.bf16.msra.mxu0 0
        %1787 = vmatprep.subr.bf16.mxu0 0
        %1788 = vmatpush1.bf16.msra.mxu0 0
        %1789 = vmatprep.subr.bf16.mxu0 0
        %1790 = vmatpush1.bf16.msra.mxu0 0
        %1791 = vmatprep.subr.bf16.mxu0 0
        %1792 = vmatpush1.bf16.msra.mxu0 0
        %1793 = vmatprep.mubr.bf16.mxu0 0
        %1794 = vmatmul.mubr.bf16.gmra.mrb[0].mxu0 %v1637
        %v1795 = vpop.f32.mrb[0].mxu0
        %v1796 = vadd.f32 %v1674, %v1795
        %v1797 = vpop.f32.mrb[0].mxu0
        %v1798 = vadd.f32 %v1678, %v1797
        %v1799 = vpop.f32.mrb[0].mxu0
        %v1800 = vadd.f32 %v1674, %v1799
        %v1801 = vpop.f32.mrb[0].mxu0
        %v1802 = vadd.f32 %v1678, %v1801
        %1803 = vmatprep.mubr.bf16.mxu0 0
        %1804 = vmatmul.mubr.bf16.gmra.mrb[0].mxu0 %v1638
        %v1805 = vpop.f32.mrb[0].mxu0
        %v1806 = vadd.f32 %v1674, %v1805
        %v1807 = vpop.f32.mrb[0].mxu0
        %v1808 = vadd.f32 %v1678, %v1807
        %v1809 = vpop.f32.mrb[0].mxu0
        %v1810 = vadd.f32 %v1674, %v1809
        %v1811 = vpop.f32.mrb[0].mxu0
        %v1812 = vadd.f32 %v1678, %v1811
        %1813 = vmatprep.mubr.bf16.mxu0 0
        %1814 = vmatmul.mubr.bf16.gmra.mrb[0].mxu0 %v1639
        %v1815 = vpop.f32.mrb[0].mxu0
        %v1816 = vadd.f32 %v1674, %v1815
        %v1817 = vpop.f32.mrb[0].mxu0
        %v1818 = vadd.f32 %v1678, %v1817
        %v1819 = vpop.f32.mrb[0].mxu0
        %v1820 = vadd.f32 %v1674, %v1819
        %v1821 = vpop.f32.mrb[0].mxu0
        %v1822 = vadd.f32 %v1678, %v1821
        %1823 = vmatprep.mubr.bf16.mxu0 0
        %1824 = vmatmul.mubr.bf16.gmra.mrb[0].mxu0 %v1640
        %v1825 = vpop.f32.mrb[0].mxu0
        %v1826 = vadd.f32 %v1674, %v1825
        %v1827 = vpop.f32.mrb[0].mxu0
        %v1828 = vadd.f32 %v1678, %v1827
        %v1829 = vpop.f32.mrb[0].mxu0
        %v1830 = vadd.f32 %v1674, %v1829
        %v1831 = vpop.f32.mrb[0].mxu0
        %v1832 = vadd.f32 %v1678, %v1831
        %1833 = vmatprep.mubr.bf16.mxu0 0
        %1834 = vmatmul.mubr.bf16.gmra.mrb[0].mxu0 %v1641
        %v1835 = vpop.f32.mrb[0].mxu0
        %v1836 = vadd.f32 %v1674, %v1835
        %v1837 = vpop.f32.mrb[0].mxu0
        %v1838 = vadd.f32 %v1678, %v1837
        %v1839 = vpop.f32.mrb[0].mxu0
        %v1840 = vadd.f32 %v1674, %v1839
        %v1841 = vpop.f32.mrb[0].mxu0
        %v1842 = vadd.f32 %v1678, %v1841
        %1843 = vmatprep.mubr.bf16.mxu0 0
        %1844 = vmatmul.mubr.bf16.gmra.mrb[0].mxu0 %v1642
        %v1845 = vpop.f32.mrb[0].mxu0
        %v1846 = vadd.f32 %v1674, %v1845
        %v1847 = vpop.f32.mrb[0].mxu0
        %v1848 = vadd.f32 %v1678, %v1847
        %v1849 = vpop.f32.mrb[0].mxu0
        %v1850 = vadd.f32 %v1674, %v1849
        %v1851 = vpop.f32.mrb[0].mxu0
        %v1852 = vadd.f32 %v1678, %v1851
        %1853 = vmatprep.mubr.bf16.mxu0 0
        %1854 = vmatmul.mubr.bf16.gmra.mrb[0].mxu0 %v1643
        %v1855 = vpop.f32.mrb[0].mxu0
        %v1856 = vadd.f32 %v1674, %v1855
        %v1857 = vpop.f32.mrb[0].mxu0
        %v1858 = vadd.f32 %v1678, %v1857
        %v1859 = vpop.f32.mrb[0].mxu0
        %v1860 = vadd.f32 %v1674, %v1859
        %v1861 = vpop.f32.mrb[0].mxu0
        %v1862 = vadd.f32 %v1678, %v1861
        %1863 = vmatprep.mubr.bf16.mxu0 0
        %1864 = vmatmul.mubr.bf16.gmra.mrb[0].mxu0 %v1644
        %v1865 = vpop.f32.mrb[0].mxu0
        %v1866 = vadd.f32 %v1674, %v1865
        %v1867 = vpop.f32.mrb[0].mxu0
        %v1868 = vadd.f32 %v1678, %v1867
        %v1869 = vpop.f32.mrb[0].mxu0
        %v1870 = vadd.f32 %v1674, %v1869
        %v1871 = vpop.f32.mrb[0].mxu0
        %v1872 = vadd.f32 %v1678, %v1871
        %1873 = vmatprep.mubr.bf16.mxu0 0
        %1874 = vmatmul.mubr.bf16.gmra.mrb[0].mxu0 %v1645
        %v1875 = vpop.f32.mrb[0].mxu0
        %v1876 = vadd.f32 %v1674, %v1875
        %v1877 = vpop.f32.mrb[0].mxu0
        %v1878 = vadd.f32 %v1678, %v1877
        %v1879 = vpop.f32.mrb[0].mxu0
        %v1880 = vadd.f32 %v1674, %v1879
        %v1881 = vpop.f32.mrb[0].mxu0
        %v1882 = vadd.f32 %v1678, %v1881
        %1883 = vmatprep.mubr.bf16.mxu0 0
        %1884 = vmatmul.mubr.bf16.gmra.mrb[0].mxu0 %v1646
        %v1885 = vpop.f32.mrb[0].mxu0
        %v1886 = vadd.f32 %v1674, %v1885
        %v1887 = vpop.f32.mrb[0].mxu0
        %v1888 = vadd.f32 %v1678, %v1887
        %v1889 = vpop.f32.mrb[0].mxu0
        %v1890 = vadd.f32 %v1674, %v1889
        %v1891 = vpop.f32.mrb[0].mxu0
        %v1892 = vadd.f32 %v1678, %v1891
        %1893 = vmatprep.mubr.bf16.mxu0 0
        %1894 = vmatmul.mubr.bf16.gmra.mrb[0].mxu0 %v1647
        %v1895 = vpop.f32.mrb[0].mxu0
        %v1896 = vadd.f32 %v1674, %v1895
        %v1897 = vpop.f32.mrb[0].mxu0
        %v1898 = vadd.f32 %v1678, %v1897
        %v1899 = vpop.f32.mrb[0].mxu0
        %v1900 = vadd.f32 %v1674, %v1899
        %v1901 = vpop.f32.mrb[0].mxu0
        %v1902 = vadd.f32 %v1678, %v1901
        %1903 = vmatprep.mubr.bf16.mxu0 0
        %1904 = vmatmul.mubr.bf16.gmra.mrb[0].mxu0 %v1648
        %v1905 = vpop.f32.mrb[0].mxu0
        %v1906 = vadd.f32 %v1674, %v1905
        %v1907 = vpop.f32.mrb[0].mxu0
        %v1908 = vadd.f32 %v1678, %v1907
        %v1909 = vpop.f32.mrb[0].mxu0
        %v1910 = vadd.f32 %v1674, %v1909
        %v1911 = vpop.f32.mrb[0].mxu0
        %v1912 = vadd.f32 %v1678, %v1911
        %1913 = vmatprep.mubr.bf16.mxu0 0
        %1914 = vmatmul.mubr.bf16.gmra.mrb[0].mxu0 %v1649
        %v1915 = vpop.f32.mrb[0].mxu0
        %v1916 = vadd.f32 %v1674, %v1915
        %v1917 = vpop.f32.mrb[0].mxu0
        %v1918 = vadd.f32 %v1678, %v1917
        %v1919 = vpop.f32.mrb[0].mxu0
        %v1920 = vadd.f32 %v1674, %v1919
        %v1921 = vpop.f32.mrb[0].mxu0
        %v1922 = vadd.f32 %v1678, %v1921
        %1923 = vmatprep.mubr.bf16.mxu0 0
        %1924 = vmatmul.mubr.bf16.gmra.mrb[0].mxu0 %v1650
        %v1925 = vpop.f32.mrb[0].mxu0
        %v1926 = vadd.f32 %v1674, %v1925
        %v1927 = vpop.f32.mrb[0].mxu0
        %v1928 = vadd.f32 %v1678, %v1927
        %v1929 = vpop.f32.mrb[0].mxu0
        %v1930 = vadd.f32 %v1674, %v1929
        %v1931 = vpop.f32.mrb[0].mxu0
        %v1932 = vadd.f32 %v1678, %v1931
        %1933 = vmatprep.mubr.bf16.mxu0 0
        %1934 = vmatmul.mubr.bf16.gmra.mrb[0].mxu0 %v1651
        %v1935 = vpop.f32.mrb[0].mxu0
        %v1936 = vadd.f32 %v1674, %v1935
        %v1937 = vpop.f32.mrb[0].mxu0
        %v1938 = vadd.f32 %v1678, %v1937
        %v1939 = vpop.f32.mrb[0].mxu0
        %v1940 = vadd.f32 %v1674, %v1939
        %v1941 = vpop.f32.mrb[0].mxu0
        %v1942 = vadd.f32 %v1678, %v1941
        %1943 = vmatprep.mubr.bf16.mxu0 0
        %1944 = vmatmul.mubr.bf16.gmra.mrb[0].mxu0 %v1652
        %v1945 = vpop.f32.mrb[0].mxu0
        %v1946 = vadd.f32 %v1674, %v1945
        %v1947 = vpop.f32.mrb[0].mxu0
        %v1948 = vadd.f32 %v1678, %v1947
        %v1949 = vpop.f32.mrb[0].mxu0
        %v1950 = vadd.f32 %v1674, %v1949
        %v1951 = vpop.f32.mrb[0].mxu0
        %v1952 = vadd.f32 %v1678, %v1951
        %1953 = vdwg.mxu0
        %v1954 = vmax.f32 %v1796, 0.0
        %v1955 = vmax.f32 %v1798, 0.0
        %v1956 = vmax.f32 %v1800, 0.0
        %v1957 = vmax.f32 %v1802, 0.0
        %v1958 = vmax.f32 %v1806, 0.0
        %v1959 = vmax.f32 %v1808, 0.0
        %v1960 = vmax.f32 %v1810, 0.0
        %v1961 = vmax.f32 %v1812, 0.0
        %v1962 = vmax.f32 %v1816, 0.0
        %v1963 = vmax.f32 %v1818, 0.0
        %v1964 = vmax.f32 %v1820, 0.0
        %v1965 = vmax.f32 %v1822, 0.0
        %v1966 = vmax.f32 %v1826, 0.0
        %v1967 = vmax.f32 %v1828, 0.0
        %v1968 = vmax.f32 %v1830, 0.0
        %v1969 = vmax.f32 %v1832, 0.0
        %v1970 = vmax.f32 %v1836, 0.0
        %v1971 = vmax.f32 %v1838, 0.0
        %v1972 = vmax.f32 %v1840, 0.0
        %v1973 = vmax.f32 %v1842, 0.0
        %v1974 = vmax.f32 %v1846, 0.0
        %v1975 = vmax.f32 %v1848, 0.0
        %v1976 = vmax.f32 %v1850, 0.0
        %v1977 = vmax.f32 %v1852, 0.0
        %v1978 = vmax.f32 %v1856, 0.0
        %v1979 = vmax.f32 %v1858, 0.0
        %v1980 = vmax.f32 %v1860, 0.0
        %v1981 = vmax.f32 %v1862, 0.0
        %v1982 = vmax.f32 %v1866, 0.0
        %v1983 = vmax.f32 %v1868, 0.0
        %v1984 = vmax.f32 %v1870, 0.0
        %v1985 = vmax.f32 %v1872, 0.0
        %v1986 = vmax.f32 %v1876, 0.0
        %v1987 = vmax.f32 %v1878, 0.0
        %v1988 = vmax.f32 %v1880, 0.0
        %v1989 = vmax.f32 %v1882, 0.0
        %v1990 = vmax.f32 %v1886, 0.0
        %v1991 = vmax.f32 %v1888, 0.0
        %v1992 = vmax.f32 %v1890, 0.0
        %v1993 = vmax.f32 %v1892, 0.0
        %v1994 = vmax.f32 %v1896, 0.0
        %v1995 = vmax.f32 %v1898, 0.0
        %v1996 = vmax.f32 %v1900, 0.0
        %v1997 = vmax.f32 %v1902, 0.0
        %v1998 = vmax.f32 %v1906, 0.0
        %v1999 = vmax.f32 %v1908, 0.0
        %v2000 = vmax.f32 %v1910, 0.0
        %v2001 = vmax.f32 %v1912, 0.0
        %v2002 = vmax.f32 %v1916, 0.0
        %v2003 = vmax.f32 %v1918, 0.0
        %v2004 = vmax.f32 %v1920, 0.0
        %v2005 = vmax.f32 %v1922, 0.0
        %v2006 = vmax.f32 %v1926, 0.0
        %v2007 = vmax.f32 %v1928, 0.0
        %v2008 = vmax.f32 %v1930, 0.0
        %v2009 = vmax.f32 %v1932, 0.0
        %v2010 = vmax.f32 %v1936, 0.0
        %v2011 = vmax.f32 %v1938, 0.0
        %v2012 = vmax.f32 %v1940, 0.0
        %v2013 = vmax.f32 %v1942, 0.0
        %v2014 = vmax.f32 %v1946, 0.0
        %v2015 = vmax.f32 %v1948, 0.0
        %v2016 = vmax.f32 %v1950, 0.0
        %v2017 = vmax.f32 %v1952, 0.0
        %v2018 = vpack.c.bf16 %v1956, %v1954
        %v2019 = vpack.c.bf16 %v1957, %v1955
        %v2020 = vpack.c.bf16 %v1960, %v1958
        %v2021 = vpack.c.bf16 %v1961, %v1959
        %v2022 = vpack.c.bf16 %v1964, %v1962
        %v2023 = vpack.c.bf16 %v1965, %v1963
        %v2024 = vpack.c.bf16 %v1968, %v1966
        %v2025 = vpack.c.bf16 %v1969, %v1967
        %v2026 = vpack.c.bf16 %v1972, %v1970
        %v2027 = vpack.c.bf16 %v1973, %v1971
        %v2028 = vpack.c.bf16 %v1976, %v1974
        %v2029 = vpack.c.bf16 %v1977, %v1975
        %v2030 = vpack.c.bf16 %v1980, %v1978
        %v2031 = vpack.c.bf16 %v1981, %v1979
        %v2032 = vpack.c.bf16 %v1984, %v1982
        %v2033 = vpack.c.bf16 %v1985, %v1983
        %v2034 = vpack.c.bf16 %v1988, %v1986
        %v2035 = vpack.c.bf16 %v1989, %v1987
        %v2036 = vpack.c.bf16 %v1992, %v1990
        %v2037 = vpack.c.bf16 %v1993, %v1991
        %v2038 = vpack.c.bf16 %v1996, %v1994
        %v2039 = vpack.c.bf16 %v1997, %v1995
        %v2040 = vpack.c.bf16 %v2000, %v1998
        %v2041 = vpack.c.bf16 %v2001, %v1999
        %v2042 = vpack.c.bf16 %v2004, %v2002
        %v2043 = vpack.c.bf16 %v2005, %v2003
        %v2044 = vpack.c.bf16 %v2008, %v2006
        %v2045 = vpack.c.bf16 %v2009, %v2007
        %v2046 = vpack.c.bf16 %v2012, %v2010
        %v2047 = vpack.c.bf16 %v2013, %v2011
        %v2048 = vpack.c.bf16 %v2016, %v2014
        %v2049 = vpack.c.bf16 %v2017, %v2015
        %v2050 = vld [vmem:[#allocation11] sm:$0xff]
        %v2051 = vld [vmem:[#allocation11 + $0x8] sm:$0xff]
        %v2052 = vld [vmem:[#allocation11 + $0x10] sm:$0xff]
        %v2053 = vld [vmem:[#allocation11 + $0x18] sm:$0xff]
        %v2054 = vld [vmem:[#allocation11 + $0x20] sm:$0xff]
        %v2055 = vld [vmem:[#allocation11 + $0x28] sm:$0xff]
        %v2056 = vld [vmem:[#allocation11 + $0x30] sm:$0xff]
        %v2057 = vld [vmem:[#allocation11 + $0x38] sm:$0xff]
        %v2058 = vld [vmem:[#allocation11 + $0x40] sm:$0xff]
        %v2059 = vld [vmem:[#allocation11 + $0x48] sm:$0xff]
        %v2060 = vld [vmem:[#allocation11 + $0x50] sm:$0xff]
        %v2061 = vld [vmem:[#allocation11 + $0x58] sm:$0xff]
        %v2062 = vld [vmem:[#allocation11 + $0x60] sm:$0xff]
        %v2063 = vld [vmem:[#allocation11 + $0x68] sm:$0xff]
        %v2064 = vld [vmem:[#allocation11 + $0x70] sm:$0xff]
        %v2065 = vld [vmem:[#allocation11 + $0x78] sm:$0xff]
        %v2066 = vld [vmem:[#allocation11 + $0x80] sm:$0xff]
        %v2067 = vld [vmem:[#allocation11 + $0x88] sm:$0xff]
        %v2068 = vld [vmem:[#allocation11 + $0x90] sm:$0xff]
        %v2069 = vld [vmem:[#allocation11 + $0x98] sm:$0xff]
        %v2070 = vld [vmem:[#allocation11 + $0xa0] sm:$0xff]
        %v2071 = vld [vmem:[#allocation11 + $0xa8] sm:$0xff]
        %v2072 = vld [vmem:[#allocation11 + $0xb0] sm:$0xff]
        %v2073 = vld [vmem:[#allocation11 + $0xb8] sm:$0xff]
        %v2074 = vld [vmem:[#allocation11 + $0xc0] sm:$0xff]
        %v2075 = vld [vmem:[#allocation11 + $0xc8] sm:$0xff]
        %v2076 = vld [vmem:[#allocation11 + $0xd0] sm:$0xff]
        %v2077 = vld [vmem:[#allocation11 + $0xd8] sm:$0xff]
        %v2078 = vld [vmem:[#allocation11 + $0xe0] sm:$0xff]
        %v2079 = vld [vmem:[#allocation11 + $0xe8] sm:$0xff]
        %v2080 = vld [vmem:[#allocation11 + $0xf0] sm:$0xff]
        %v2081 = vld [vmem:[#allocation11 + $0xf8] sm:$0xff]
        %v2082 = vld [vmem:[%s9] sm:$0x3]
        %v2084 = vlaneseq
        %v2085 = vshrl.u32 %v2084, 7
        %v2086 = vsub.s32 0, %v2085
        %v2087 = vrot.slane %v2082, %v2086
        %v2088 = vlaneseq
        %v2089 = vshrl.u32 %v2088, 7
        %v2090 = vsub.s32 1, %v2089
        %v2091 = vrot.slane %v2082, %v2090
        %v2126 = vunpack.c.l.b16 %v2050
        %v2127 = vunpack.c.h.b16 %v2050
        %v2128 = vunpack.c.l.b16 %v2051
        %v2129 = vunpack.c.h.b16 %v2051
        %v2130 = vunpack.c.l.b16 %v2052
        %v2131 = vunpack.c.h.b16 %v2052
        %v2132 = vunpack.c.l.b16 %v2053
        %v2133 = vunpack.c.h.b16 %v2053
        %v2134 = vunpack.c.l.b16 %v2054
        %v2135 = vunpack.c.h.b16 %v2054
        %v2136 = vunpack.c.l.b16 %v2055
        %v2137 = vunpack.c.h.b16 %v2055
        %v2138 = vunpack.c.l.b16 %v2056
        %v2139 = vunpack.c.h.b16 %v2056
        %v2140 = vunpack.c.l.b16 %v2057
        %v2141 = vunpack.c.h.b16 %v2057
        %v2142 = vunpack.c.l.b16 %v2058
        %v2143 = vunpack.c.h.b16 %v2058
        %v2144 = vunpack.c.l.b16 %v2059
        %v2145 = vunpack.c.h.b16 %v2059
        %v2146 = vunpack.c.l.b16 %v2060
        %v2147 = vunpack.c.h.b16 %v2060
        %v2148 = vunpack.c.l.b16 %v2061
        %v2149 = vunpack.c.h.b16 %v2061
        %v2150 = vunpack.c.l.b16 %v2062
        %v2151 = vunpack.c.h.b16 %v2062
        %v2152 = vunpack.c.l.b16 %v2063
        %v2153 = vunpack.c.h.b16 %v2063
        %v2154 = vunpack.c.l.b16 %v2064
        %v2155 = vunpack.c.h.b16 %v2064
        %v2156 = vunpack.c.l.b16 %v2065
        %v2157 = vunpack.c.h.b16 %v2065
        %v2158 = vunpack.c.l.b16 %v2066
        %v2159 = vunpack.c.h.b16 %v2066
        %v2160 = vunpack.c.l.b16 %v2067
        %v2161 = vunpack.c.h.b16 %v2067
        %v2162 = vunpack.c.l.b16 %v2068
        %v2163 = vunpack.c.h.b16 %v2068
        %v2164 = vunpack.c.l.b16 %v2069
        %v2165 = vunpack.c.h.b16 %v2069
        %v2166 = vunpack.c.l.b16 %v2070
        %v2167 = vunpack.c.h.b16 %v2070
        %v2168 = vunpack.c.l.b16 %v2071
        %v2169 = vunpack.c.h.b16 %v2071
        %v2170 = vunpack.c.l.b16 %v2072
        %v2171 = vunpack.c.h.b16 %v2072
        %v2172 = vunpack.c.l.b16 %v2073
        %v2173 = vunpack.c.h.b16 %v2073
        %v2174 = vunpack.c.l.b16 %v2074
        %v2175 = vunpack.c.h.b16 %v2074
        %v2176 = vunpack.c.l.b16 %v2075
        %v2177 = vunpack.c.h.b16 %v2075
        %v2178 = vunpack.c.l.b16 %v2076
        %v2179 = vunpack.c.h.b16 %v2076
        %v2180 = vunpack.c.l.b16 %v2077
        %v2181 = vunpack.c.h.b16 %v2077
        %v2182 = vunpack.c.l.b16 %v2078
        %v2183 = vunpack.c.h.b16 %v2078
        %v2184 = vunpack.c.l.b16 %v2079
        %v2185 = vunpack.c.h.b16 %v2079
        %v2186 = vunpack.c.l.b16 %v2080
        %v2187 = vunpack.c.h.b16 %v2080
        %v2188 = vunpack.c.l.b16 %v2081
        %v2189 = vunpack.c.h.b16 %v2081
        %v2190 = vpack.c.b16 %v2128, %v2126
        %v2191 = vpack.c.b16 %v2129, %v2127
        %v2192 = vpack.c.b16 %v2132, %v2130
        %v2193 = vpack.c.b16 %v2133, %v2131
        %v2194 = vpack.c.b16 %v2136, %v2134
        %v2195 = vpack.c.b16 %v2137, %v2135
        %v2196 = vpack.c.b16 %v2140, %v2138
        %v2197 = vpack.c.b16 %v2141, %v2139
        %v2198 = vpack.c.b16 %v2144, %v2142
        %v2199 = vpack.c.b16 %v2145, %v2143
        %v2200 = vpack.c.b16 %v2148, %v2146
        %v2201 = vpack.c.b16 %v2149, %v2147
        %v2202 = vpack.c.b16 %v2152, %v2150
        %v2203 = vpack.c.b16 %v2153, %v2151
        %v2204 = vpack.c.b16 %v2156, %v2154
        %v2205 = vpack.c.b16 %v2157, %v2155
        %v2206 = vpack.c.b16 %v2160, %v2158
        %v2207 = vpack.c.b16 %v2161, %v2159
        %v2208 = vpack.c.b16 %v2164, %v2162
        %v2209 = vpack.c.b16 %v2165, %v2163
        %v2210 = vpack.c.b16 %v2168, %v2166
        %v2211 = vpack.c.b16 %v2169, %v2167
        %v2212 = vpack.c.b16 %v2172, %v2170
        %v2213 = vpack.c.b16 %v2173, %v2171
        %v2214 = vpack.c.b16 %v2176, %v2174
        %v2215 = vpack.c.b16 %v2177, %v2175
        %v2216 = vpack.c.b16 %v2180, %v2178
        %v2217 = vpack.c.b16 %v2181, %v2179
        %v2218 = vpack.c.b16 %v2184, %v2182
        %v2219 = vpack.c.b16 %v2185, %v2183
        %v2220 = vpack.c.b16 %v2188, %v2186
        %v2221 = vpack.c.b16 %v2189, %v2187
        %2254 = vmatprep.subr.bf16.mxu0 %v2191
        %2255 = vmatpush1.bf16.msra.mxu0 %v2190
        %2256 = vmatprep.subr.bf16.mxu0 %v2193
        %2257 = vmatpush1.bf16.msra.mxu0 %v2192
        %2258 = vmatprep.subr.bf16.mxu0 %v2195
        %2259 = vmatpush1.bf16.msra.mxu0 %v2194
        %2260 = vmatprep.subr.bf16.mxu0 %v2197
        %2261 = vmatpush1.bf16.msra.mxu0 %v2196
        %2262 = vmatprep.subr.bf16.mxu0 %v2199
        %2263 = vmatpush1.bf16.msra.mxu0 %v2198
        %2264 = vmatprep.subr.bf16.mxu0 %v2201
        %2265 = vmatpush1.bf16.msra.mxu0 %v2200
        %2266 = vmatprep.subr.bf16.mxu0 %v2203
        %2267 = vmatpush1.bf16.msra.mxu0 %v2202
        %2268 = vmatprep.subr.bf16.mxu0 %v2205
        %2269 = vmatpush1.bf16.msra.mxu0 %v2204
        %2270 = vmatprep.subr.bf16.mxu0 %v2207
        %2271 = vmatpush1.bf16.msra.mxu0 %v2206
        %2272 = vmatprep.subr.bf16.mxu0 %v2209
        %2273 = vmatpush1.bf16.msra.mxu0 %v2208
        %2274 = vmatprep.subr.bf16.mxu0 %v2211
        %2275 = vmatpush1.bf16.msra.mxu0 %v2210
        %2276 = vmatprep.subr.bf16.mxu0 %v2213
        %2277 = vmatpush1.bf16.msra.mxu0 %v2212
        %2278 = vmatprep.subr.bf16.mxu0 %v2215
        %2279 = vmatpush1.bf16.msra.mxu0 %v2214
        %2280 = vmatprep.subr.bf16.mxu0 %v2217
        %2281 = vmatpush1.bf16.msra.mxu0 %v2216
        %2282 = vmatprep.subr.bf16.mxu0 %v2219
        %2283 = vmatpush1.bf16.msra.mxu0 %v2218
        %2284 = vmatprep.subr.bf16.mxu0 %v2221
        %2285 = vmatpush1.bf16.msra.mxu0 %v2220
        %2286 = vmatprep.mubr.bf16.mxu0 %v2019
        %2287 = vmatmul.mubr.bf16.gmra.mrb[0].mxu0 %v2018
        %v2288 = vpop.f32.mrb[0].mxu0
        %v2289 = vadd.f32 %v2087, %v2288
        %v2290 = vpop.f32.mrb[0].mxu0
        %v2291 = vadd.f32 %v2091, %v2290
        %v2292 = vpop.f32.mrb[0].mxu0
        %v2293 = vadd.f32 %v2087, %v2292
        %v2294 = vpop.f32.mrb[0].mxu0
        %v2295 = vadd.f32 %v2091, %v2294
        %2296 = vmatprep.mubr.bf16.mxu0 %v2021
        %2297 = vmatmul.mubr.bf16.gmra.mrb[0].mxu0 %v2020
        %v2298 = vpop.f32.mrb[0].mxu0
        %v2299 = vadd.f32 %v2087, %v2298
        %v2300 = vpop.f32.mrb[0].mxu0
        %v2301 = vadd.f32 %v2091, %v2300
        %v2302 = vpop.f32.mrb[0].mxu0
        %v2303 = vadd.f32 %v2087, %v2302
        %v2304 = vpop.f32.mrb[0].mxu0
        %v2305 = vadd.f32 %v2091, %v2304
        %2306 = vmatprep.mubr.bf16.mxu0 %v2023
        %2307 = vmatmul.mubr.bf16.gmra.mrb[0].mxu0 %v2022
        %v2308 = vpop.f32.mrb[0].mxu0
        %v2309 = vadd.f32 %v2087, %v2308
        %v2310 = vpop.f32.mrb[0].mxu0
        %v2311 = vadd.f32 %v2091, %v2310
        %v2312 = vpop.f32.mrb[0].mxu0
        %v2313 = vadd.f32 %v2087, %v2312
        %v2314 = vpop.f32.mrb[0].mxu0
        %v2315 = vadd.f32 %v2091, %v2314
        %2316 = vmatprep.mubr.bf16.mxu0 %v2025
        %2317 = vmatmul.mubr.bf16.gmra.mrb[0].mxu0 %v2024
        %v2318 = vpop.f32.mrb[0].mxu0
        %v2319 = vadd.f32 %v2087, %v2318
        %v2320 = vpop.f32.mrb[0].mxu0
        %v2321 = vadd.f32 %v2091, %v2320
        %v2322 = vpop.f32.mrb[0].mxu0
        %v2323 = vadd.f32 %v2087, %v2322
        %v2324 = vpop.f32.mrb[0].mxu0
        %v2325 = vadd.f32 %v2091, %v2324
        %2326 = vmatprep.mubr.bf16.mxu0 %v2027
        %2327 = vmatmul.mubr.bf16.gmra.mrb[0].mxu0 %v2026
        %v2328 = vpop.f32.mrb[0].mxu0
        %v2329 = vadd.f32 %v2087, %v2328
        %v2330 = vpop.f32.mrb[0].mxu0
        %v2331 = vadd.f32 %v2091, %v2330
        %v2332 = vpop.f32.mrb[0].mxu0
        %v2333 = vadd.f32 %v2087, %v2332
        %v2334 = vpop.f32.mrb[0].mxu0
        %v2335 = vadd.f32 %v2091, %v2334
        %2336 = vmatprep.mubr.bf16.mxu0 %v2029
        %2337 = vmatmul.mubr.bf16.gmra.mrb[0].mxu0 %v2028
        %v2338 = vpop.f32.mrb[0].mxu0
        %v2339 = vadd.f32 %v2087, %v2338
        %v2340 = vpop.f32.mrb[0].mxu0
        %v2341 = vadd.f32 %v2091, %v2340
        %v2342 = vpop.f32.mrb[0].mxu0
        %v2343 = vadd.f32 %v2087, %v2342
        %v2344 = vpop.f32.mrb[0].mxu0
        %v2345 = vadd.f32 %v2091, %v2344
        %2346 = vmatprep.mubr.bf16.mxu0 %v2031
        %2347 = vmatmul.mubr.bf16.gmra.mrb[0].mxu0 %v2030
        %v2348 = vpop.f32.mrb[0].mxu0
        %v2349 = vadd.f32 %v2087, %v2348
        %v2350 = vpop.f32.mrb[0].mxu0
        %v2351 = vadd.f32 %v2091, %v2350
        %v2352 = vpop.f32.mrb[0].mxu0
        %v2353 = vadd.f32 %v2087, %v2352
        %v2354 = vpop.f32.mrb[0].mxu0
        %v2355 = vadd.f32 %v2091, %v2354
        %2356 = vmatprep.mubr.bf16.mxu0 %v2033
        %2357 = vmatmul.mubr.bf16.gmra.mrb[0].mxu0 %v2032
        %v2358 = vpop.f32.mrb[0].mxu0
        %v2359 = vadd.f32 %v2087, %v2358
        %v2360 = vpop.f32.mrb[0].mxu0
        %v2361 = vadd.f32 %v2091, %v2360
        %v2362 = vpop.f32.mrb[0].mxu0
        %v2363 = vadd.f32 %v2087, %v2362
        %v2364 = vpop.f32.mrb[0].mxu0
        %v2365 = vadd.f32 %v2091, %v2364
        %2366 = vmatprep.mubr.bf16.mxu0 %v2035
        %2367 = vmatmul.mubr.bf16.gmra.mrb[0].mxu0 %v2034
        %v2368 = vpop.f32.mrb[0].mxu0
        %v2369 = vadd.f32 %v2087, %v2368
        %v2370 = vpop.f32.mrb[0].mxu0
        %v2371 = vadd.f32 %v2091, %v2370
        %v2372 = vpop.f32.mrb[0].mxu0
        %v2373 = vadd.f32 %v2087, %v2372
        %v2374 = vpop.f32.mrb[0].mxu0
        %v2375 = vadd.f32 %v2091, %v2374
        %2376 = vmatprep.mubr.bf16.mxu0 %v2037
        %2377 = vmatmul.mubr.bf16.gmra.mrb[0].mxu0 %v2036
        %v2378 = vpop.f32.mrb[0].mxu0
        %v2379 = vadd.f32 %v2087, %v2378
        %v2380 = vpop.f32.mrb[0].mxu0
        %v2381 = vadd.f32 %v2091, %v2380
        %v2382 = vpop.f32.mrb[0].mxu0
        %v2383 = vadd.f32 %v2087, %v2382
        %v2384 = vpop.f32.mrb[0].mxu0
        %v2385 = vadd.f32 %v2091, %v2384
        %2386 = vmatprep.mubr.bf16.mxu0 %v2039
        %2387 = vmatmul.mubr.bf16.gmra.mrb[0].mxu0 %v2038
        %v2388 = vpop.f32.mrb[0].mxu0
        %v2389 = vadd.f32 %v2087, %v2388
        %v2390 = vpop.f32.mrb[0].mxu0
        %v2391 = vadd.f32 %v2091, %v2390
        %v2392 = vpop.f32.mrb[0].mxu0
        %v2393 = vadd.f32 %v2087, %v2392
        %v2394 = vpop.f32.mrb[0].mxu0
        %v2395 = vadd.f32 %v2091, %v2394
        %2396 = vmatprep.mubr.bf16.mxu0 %v2041
        %2397 = vmatmul.mubr.bf16.gmra.mrb[0].mxu0 %v2040
        %v2398 = vpop.f32.mrb[0].mxu0
        %v2399 = vadd.f32 %v2087, %v2398
        %v2400 = vpop.f32.mrb[0].mxu0
        %v2401 = vadd.f32 %v2091, %v2400
        %v2402 = vpop.f32.mrb[0].mxu0
        %v2403 = vadd.f32 %v2087, %v2402
        %v2404 = vpop.f32.mrb[0].mxu0
        %v2405 = vadd.f32 %v2091, %v2404
        %2406 = vmatprep.mubr.bf16.mxu0 %v2043
        %2407 = vmatmul.mubr.bf16.gmra.mrb[0].mxu0 %v2042
        %v2408 = vpop.f32.mrb[0].mxu0
        %v2409 = vadd.f32 %v2087, %v2408
        %v2410 = vpop.f32.mrb[0].mxu0
        %v2411 = vadd.f32 %v2091, %v2410
        %v2412 = vpop.f32.mrb[0].mxu0
        %v2413 = vadd.f32 %v2087, %v2412
        %v2414 = vpop.f32.mrb[0].mxu0
        %v2415 = vadd.f32 %v2091, %v2414
        %2416 = vmatprep.mubr.bf16.mxu0 %v2045
        %2417 = vmatmul.mubr.bf16.gmra.mrb[0].mxu0 %v2044
        %v2418 = vpop.f32.mrb[0].mxu0
        %v2419 = vadd.f32 %v2087, %v2418
        %v2420 = vpop.f32.mrb[0].mxu0
        %v2421 = vadd.f32 %v2091, %v2420
        %v2422 = vpop.f32.mrb[0].mxu0
        %v2423 = vadd.f32 %v2087, %v2422
        %v2424 = vpop.f32.mrb[0].mxu0
        %v2425 = vadd.f32 %v2091, %v2424
        %2426 = vmatprep.mubr.bf16.mxu0 %v2047
        %2427 = vmatmul.mubr.bf16.gmra.mrb[0].mxu0 %v2046
        %v2428 = vpop.f32.mrb[0].mxu0
        %v2429 = vadd.f32 %v2087, %v2428
        %v2430 = vpop.f32.mrb[0].mxu0
        %v2431 = vadd.f32 %v2091, %v2430
        %v2432 = vpop.f32.mrb[0].mxu0
        %v2433 = vadd.f32 %v2087, %v2432
        %v2434 = vpop.f32.mrb[0].mxu0
        %v2435 = vadd.f32 %v2091, %v2434
        %2436 = vmatprep.mubr.bf16.mxu0 %v2049
        %2437 = vmatmul.mubr.bf16.gmra.mrb[0].mxu0 %v2048
        %v2438 = vpop.f32.mrb[0].mxu0
        %v2439 = vadd.f32 %v2087, %v2438
        %v2440 = vpop.f32.mrb[0].mxu0
        %v2441 = vadd.f32 %v2091, %v2440
        %v2442 = vpop.f32.mrb[0].mxu0
        %v2443 = vadd.f32 %v2087, %v2442
        %v2444 = vpop.f32.mrb[0].mxu0
        %v2445 = vadd.f32 %v2091, %v2444
        %2446 = vdwg.mxu0
        %v2447 = vsub.f32 0.0, %v2289
        %v2448 = vsub.f32 0.0, %v2291
        %v2449 = vsub.f32 0.0, %v2293
        %v2450 = vsub.f32 0.0, %v2295
        %v2451 = vsub.f32 0.0, %v2299
        %v2452 = vsub.f32 0.0, %v2301
        %v2453 = vsub.f32 0.0, %v2303
        %v2454 = vsub.f32 0.0, %v2305
        %v2455 = vsub.f32 0.0, %v2309
        %v2456 = vsub.f32 0.0, %v2311
        %v2457 = vsub.f32 0.0, %v2313
        %v2458 = vsub.f32 0.0, %v2315
        %v2459 = vsub.f32 0.0, %v2319
        %v2460 = vsub.f32 0.0, %v2321
        %v2461 = vsub.f32 0.0, %v2323
        %v2462 = vsub.f32 0.0, %v2325
        %v2463 = vsub.f32 0.0, %v2329
        %v2464 = vsub.f32 0.0, %v2331
        %v2465 = vsub.f32 0.0, %v2333
        %v2466 = vsub.f32 0.0, %v2335
        %v2467 = vsub.f32 0.0, %v2339
        %v2468 = vsub.f32 0.0, %v2341
        %v2469 = vsub.f32 0.0, %v2343
        %v2470 = vsub.f32 0.0, %v2345
        %v2471 = vsub.f32 0.0, %v2349
        %v2472 = vsub.f32 0.0, %v2351
        %v2473 = vsub.f32 0.0, %v2353
        %v2474 = vsub.f32 0.0, %v2355
        %v2475 = vsub.f32 0.0, %v2359
        %v2476 = vsub.f32 0.0, %v2361
        %v2477 = vsub.f32 0.0, %v2363
        %v2478 = vsub.f32 0.0, %v2365
        %v2479 = vsub.f32 0.0, %v2369
        %v2480 = vsub.f32 0.0, %v2371
        %v2481 = vsub.f32 0.0, %v2373
        %v2482 = vsub.f32 0.0, %v2375
        %v2483 = vsub.f32 0.0, %v2379
        %v2484 = vsub.f32 0.0, %v2381
        %v2485 = vsub.f32 0.0, %v2383
        %v2486 = vsub.f32 0.0, %v2385
        %v2487 = vsub.f32 0.0, %v2389
        %v2488 = vsub.f32 0.0, %v2391
        %v2489 = vsub.f32 0.0, %v2393
        %v2490 = vsub.f32 0.0, %v2395
        %v2491 = vsub.f32 0.0, %v2399
        %v2492 = vsub.f32 0.0, %v2401
        %v2493 = vsub.f32 0.0, %v2403
        %v2494 = vsub.f32 0.0, %v2405
        %v2495 = vsub.f32 0.0, %v2409
        %v2496 = vsub.f32 0.0, %v2411
        %v2497 = vsub.f32 0.0, %v2413
        %v2498 = vsub.f32 0.0, %v2415
        %v2499 = vsub.f32 0.0, %v2419
        %v2500 = vsub.f32 0.0, %v2421
        %v2501 = vsub.f32 0.0, %v2423
        %v2502 = vsub.f32 0.0, %v2425
        %v2503 = vsub.f32 0.0, %v2429
        %v2504 = vsub.f32 0.0, %v2431
        %v2505 = vsub.f32 0.0, %v2433
        %v2506 = vsub.f32 0.0, %v2435
        %v2507 = vsub.f32 0.0, %v2439
        %v2508 = vsub.f32 0.0, %v2441
        %v2509 = vsub.f32 0.0, %v2443
        %v2510 = vsub.f32 0.0, %v2445
        %v2511 = vmul.f32 %v2447, 1.442695
        %v2512 = vpow.pop %v2511
        %v2513 = vmul.f32 %v2448, 1.442695
        %v2514 = vpow.pop %v2513
        %v2515 = vmul.f32 %v2449, 1.442695
        %v2516 = vpow.pop %v2515
        %v2517 = vmul.f32 %v2450, 1.442695
        %v2518 = vpow.pop %v2517
        %v2519 = vmul.f32 %v2451, 1.442695
        %v2520 = vpow.pop %v2519
        %v2521 = vmul.f32 %v2452, 1.442695
        %v2522 = vpow.pop %v2521
        %v2523 = vmul.f32 %v2453, 1.442695
        %v2524 = vpow.pop %v2523
        %v2525 = vmul.f32 %v2454, 1.442695
        %v2526 = vpow.pop %v2525
        %v2527 = vmul.f32 %v2455, 1.442695
        %v2528 = vpow.pop %v2527
        %v2529 = vmul.f32 %v2456, 1.442695
        %v2530 = vpow.pop %v2529
        %v2531 = vmul.f32 %v2457, 1.442695
        %v2532 = vpow.pop %v2531
        %v2533 = vmul.f32 %v2458, 1.442695
        %v2534 = vpow.pop %v2533
        %v2535 = vmul.f32 %v2459, 1.442695
        %v2536 = vpow.pop %v2535
        %v2537 = vmul.f32 %v2460, 1.442695
        %v2538 = vpow.pop %v2537
        %v2539 = vmul.f32 %v2461, 1.442695
        %v2540 = vpow.pop %v2539
        %v2541 = vmul.f32 %v2462, 1.442695
        %v2542 = vpow.pop %v2541
        %v2543 = vmul.f32 %v2463, 1.442695
        %v2544 = vpow.pop %v2543
        %v2545 = vmul.f32 %v2464, 1.442695
        %v2546 = vpow.pop %v2545
        %v2547 = vmul.f32 %v2465, 1.442695
        %v2548 = vpow.pop %v2547
        %v2549 = vmul.f32 %v2466, 1.442695
        %v2550 = vpow.pop %v2549
        %v2551 = vmul.f32 %v2467, 1.442695
        %v2552 = vpow.pop %v2551
        %v2553 = vmul.f32 %v2468, 1.442695
        %v2554 = vpow.pop %v2553
        %v2555 = vmul.f32 %v2469, 1.442695
        %v2556 = vpow.pop %v2555
        %v2557 = vmul.f32 %v2470, 1.442695
        %v2558 = vpow.pop %v2557
        %v2559 = vmul.f32 %v2471, 1.442695
        %v2560 = vpow.pop %v2559
        %v2561 = vmul.f32 %v2472, 1.442695
        %v2562 = vpow.pop %v2561
        %v2563 = vmul.f32 %v2473, 1.442695
        %v2564 = vpow.pop %v2563
        %v2565 = vmul.f32 %v2474, 1.442695
        %v2566 = vpow.pop %v2565
        %v2567 = vmul.f32 %v2475, 1.442695
        %v2568 = vpow.pop %v2567
        %v2569 = vmul.f32 %v2476, 1.442695
        %v2570 = vpow.pop %v2569
        %v2571 = vmul.f32 %v2477, 1.442695
        %v2572 = vpow.pop %v2571
        %v2573 = vmul.f32 %v2478, 1.442695
        %v2574 = vpow.pop %v2573
        %v2575 = vmul.f32 %v2479, 1.442695
        %v2576 = vpow.pop %v2575
        %v2577 = vmul.f32 %v2480, 1.442695
        %v2578 = vpow.pop %v2577
        %v2579 = vmul.f32 %v2481, 1.442695
        %v2580 = vpow.pop %v2579
        %v2581 = vmul.f32 %v2482, 1.442695
        %v2582 = vpow.pop %v2581
        %v2583 = vmul.f32 %v2483, 1.442695
        %v2584 = vpow.pop %v2583
        %v2585 = vmul.f32 %v2484, 1.442695
        %v2586 = vpow.pop %v2585
        %v2587 = vmul.f32 %v2485, 1.442695
        %v2588 = vpow.pop %v2587
        %v2589 = vmul.f32 %v2486, 1.442695
        %v2590 = vpow.pop %v2589
        %v2591 = vmul.f32 %v2487, 1.442695
        %v2592 = vpow.pop %v2591
        %v2593 = vmul.f32 %v2488, 1.442695
        %v2594 = vpow.pop %v2593
        %v2595 = vmul.f32 %v2489, 1.442695
        %v2596 = vpow.pop %v2595
        %v2597 = vmul.f32 %v2490, 1.442695
        %v2598 = vpow.pop %v2597
        %v2599 = vmul.f32 %v2491, 1.442695
        %v2600 = vpow.pop %v2599
        %v2601 = vmul.f32 %v2492, 1.442695
        %v2602 = vpow.pop %v2601
        %v2603 = vmul.f32 %v2493, 1.442695
        %v2604 = vpow.pop %v2603
        %v2605 = vmul.f32 %v2494, 1.442695
        %v2606 = vpow.pop %v2605
        %v2607 = vmul.f32 %v2495, 1.442695
        %v2608 = vpow.pop %v2607
        %v2609 = vmul.f32 %v2496, 1.442695
        %v2610 = vpow.pop %v2609
        %v2611 = vmul.f32 %v2497, 1.442695
        %v2612 = vpow.pop %v2611
        %v2613 = vmul.f32 %v2498, 1.442695
        %v2614 = vpow.pop %v2613
        %v2615 = vmul.f32 %v2499, 1.442695
        %v2616 = vpow.pop %v2615
        %v2617 = vmul.f32 %v2500, 1.442695
        %v2618 = vpow.pop %v2617
        %v2619 = vmul.f32 %v2501, 1.442695
        %v2620 = vpow.pop %v2619
        %v2621 = vmul.f32 %v2502, 1.442695
        %v2622 = vpow.pop %v2621
        %v2623 = vmul.f32 %v2503, 1.442695
        %v2624 = vpow.pop %v2623
        %v2625 = vmul.f32 %v2504, 1.442695
        %v2626 = vpow.pop %v2625
        %v2627 = vmul.f32 %v2505, 1.442695
        %v2628 = vpow.pop %v2627
        %v2629 = vmul.f32 %v2506, 1.442695
        %v2630 = vpow.pop %v2629
        %v2631 = vmul.f32 %v2507, 1.442695
        %v2632 = vpow.pop %v2631
        %v2633 = vmul.f32 %v2508, 1.442695
        %v2634 = vpow.pop %v2633
        %v2635 = vmul.f32 %v2509, 1.442695
        %v2636 = vpow.pop %v2635
        %v2637 = vmul.f32 %v2510, 1.442695
        %v2638 = vpow.pop %v2637
        %v2639 = vadd.f32 %v2512, 1.0
        %v2640 = vadd.f32 %v2514, 1.0
        %v2641 = vadd.f32 %v2516, 1.0
        %v2642 = vadd.f32 %v2518, 1.0
        %v2643 = vadd.f32 %v2520, 1.0
        %v2644 = vadd.f32 %v2522, 1.0
        %v2645 = vadd.f32 %v2524, 1.0
        %v2646 = vadd.f32 %v2526, 1.0
        %v2647 = vadd.f32 %v2528, 1.0
        %v2648 = vadd.f32 %v2530, 1.0
        %v2649 = vadd.f32 %v2532, 1.0
        %v2650 = vadd.f32 %v2534, 1.0
        %v2651 = vadd.f32 %v2536, 1.0
        %v2652 = vadd.f32 %v2538, 1.0
        %v2653 = vadd.f32 %v2540, 1.0
        %v2654 = vadd.f32 %v2542, 1.0
        %v2655 = vadd.f32 %v2544, 1.0
        %v2656 = vadd.f32 %v2546, 1.0
        %v2657 = vadd.f32 %v2548, 1.0
        %v2658 = vadd.f32 %v2550, 1.0
        %v2659 = vadd.f32 %v2552, 1.0
        %v2660 = vadd.f32 %v2554, 1.0
        %v2661 = vadd.f32 %v2556, 1.0
        %v2662 = vadd.f32 %v2558, 1.0
        %v2663 = vadd.f32 %v2560, 1.0
        %v2664 = vadd.f32 %v2562, 1.0
        %v2665 = vadd.f32 %v2564, 1.0
        %v2666 = vadd.f32 %v2566, 1.0
        %v2667 = vadd.f32 %v2568, 1.0
        %v2668 = vadd.f32 %v2570, 1.0
        %v2669 = vadd.f32 %v2572, 1.0
        %v2670 = vadd.f32 %v2574, 1.0
        %v2671 = vadd.f32 %v2576, 1.0
        %v2672 = vadd.f32 %v2578, 1.0
        %v2673 = vadd.f32 %v2580, 1.0
        %v2674 = vadd.f32 %v2582, 1.0
        %v2675 = vadd.f32 %v2584, 1.0
        %v2676 = vadd.f32 %v2586, 1.0
        %v2677 = vadd.f32 %v2588, 1.0
        %v2678 = vadd.f32 %v2590, 1.0
        %v2679 = vadd.f32 %v2592, 1.0
        %v2680 = vadd.f32 %v2594, 1.0
        %v2681 = vadd.f32 %v2596, 1.0
        %v2682 = vadd.f32 %v2598, 1.0
        %v2683 = vadd.f32 %v2600, 1.0
        %v2684 = vadd.f32 %v2602, 1.0
        %v2685 = vadd.f32 %v2604, 1.0
        %v2686 = vadd.f32 %v2606, 1.0
        %v2687 = vadd.f32 %v2608, 1.0
        %v2688 = vadd.f32 %v2610, 1.0
        %v2689 = vadd.f32 %v2612, 1.0
        %v2690 = vadd.f32 %v2614, 1.0
        %v2691 = vadd.f32 %v2616, 1.0
        %v2692 = vadd.f32 %v2618, 1.0
        %v2693 = vadd.f32 %v2620, 1.0
        %v2694 = vadd.f32 %v2622, 1.0
        %v2695 = vadd.f32 %v2624, 1.0
        %v2696 = vadd.f32 %v2626, 1.0
        %v2697 = vadd.f32 %v2628, 1.0
        %v2698 = vadd.f32 %v2630, 1.0
        %v2699 = vadd.f32 %v2632, 1.0
        %v2700 = vadd.f32 %v2634, 1.0
        %v2701 = vadd.f32 %v2636, 1.0
        %v2702 = vadd.f32 %v2638, 1.0
        %v2703 = vrcp.pop %v2639
        %v2704 = vrcp.pop %v2640
        %v2705 = vrcp.pop %v2641
        %v2706 = vrcp.pop %v2642
        %v2707 = vrcp.pop %v2643
        %v2708 = vrcp.pop %v2644
        %v2709 = vrcp.pop %v2645
        %v2710 = vrcp.pop %v2646
        %v2711 = vrcp.pop %v2647
        %v2712 = vrcp.pop %v2648
        %v2713 = vrcp.pop %v2649
        %v2714 = vrcp.pop %v2650
        %v2715 = vrcp.pop %v2651
        %v2716 = vrcp.pop %v2652
        %v2717 = vrcp.pop %v2653
        %v2718 = vrcp.pop %v2654
        %v2719 = vrcp.pop %v2655
        %v2720 = vrcp.pop %v2656
        %v2721 = vrcp.pop %v2657
        %v2722 = vrcp.pop %v2658
        %v2723 = vrcp.pop %v2659
        %v2724 = vrcp.pop %v2660
        %v2725 = vrcp.pop %v2661
        %v2726 = vrcp.pop %v2662
        %v2727 = vrcp.pop %v2663
        %v2728 = vrcp.pop %v2664
        %v2729 = vrcp.pop %v2665
        %v2730 = vrcp.pop %v2666
        %v2731 = vrcp.pop %v2667
        %v2732 = vrcp.pop %v2668
        %v2733 = vrcp.pop %v2669
        %v2734 = vrcp.pop %v2670
        %v2735 = vrcp.pop %v2671
        %v2736 = vrcp.pop %v2672
        %v2737 = vrcp.pop %v2673
        %v2738 = vrcp.pop %v2674
        %v2739 = vrcp.pop %v2675
        %v2740 = vrcp.pop %v2676
        %v2741 = vrcp.pop %v2677
        %v2742 = vrcp.pop %v2678
        %v2743 = vrcp.pop %v2679
        %v2744 = vrcp.pop %v2680
        %v2745 = vrcp.pop %v2681
        %v2746 = vrcp.pop %v2682
        %v2747 = vrcp.pop %v2683
        %v2748 = vrcp.pop %v2684
        %v2749 = vrcp.pop %v2685
        %v2750 = vrcp.pop %v2686
        %v2751 = vrcp.pop %v2687
        %v2752 = vrcp.pop %v2688
        %v2753 = vrcp.pop %v2689
        %v2754 = vrcp.pop %v2690
        %v2755 = vrcp.pop %v2691
        %v2756 = vrcp.pop %v2692
        %v2757 = vrcp.pop %v2693
        %v2758 = vrcp.pop %v2694
        %v2759 = vrcp.pop %v2695
        %v2760 = vrcp.pop %v2696
        %v2761 = vrcp.pop %v2697
        %v2762 = vrcp.pop %v2698
        %v2763 = vrcp.pop %v2699
        %v2764 = vrcp.pop %v2700
        %v2765 = vrcp.pop %v2701
        %v2766 = vrcp.pop %v2702
        %2767 = vst [vmem:[%s534] sm:$0xff] %v2703
        %2768 = vst [vmem:[%s534 + $0x8] sm:$0xff] %v2704
        %2769 = vst [vmem:[%s534 + $0x10] sm:$0xff] %v2705
        %2770 = vst [vmem:[%s534 + $0x18] sm:$0xff] %v2706
        %2771 = vst [vmem:[%s534 + $0x20] sm:$0xff] %v2707
        %2772 = vst [vmem:[%s534 + $0x28] sm:$0xff] %v2708
        %2773 = vst [vmem:[%s534 + $0x30] sm:$0xff] %v2709
        %2774 = vst [vmem:[%s534 + $0x38] sm:$0xff] %v2710
        %2775 = vst [vmem:[%s534 + $0x40] sm:$0xff] %v2711
        %2776 = vst [vmem:[%s534 + $0x48] sm:$0xff] %v2712
        %2777 = vst [vmem:[%s534 + $0x50] sm:$0xff] %v2713
        %2778 = vst [vmem:[%s534 + $0x58] sm:$0xff] %v2714
        %2779 = vst [vmem:[%s534 + $0x60] sm:$0xff] %v2715
        %2780 = vst [vmem:[%s534 + $0x68] sm:$0xff] %v2716
        %2781 = vst [vmem:[%s534 + $0x70] sm:$0xff] %v2717
        %2782 = vst [vmem:[%s534 + $0x78] sm:$0xff] %v2718
        %2783 = vst [vmem:[%s534 + $0x80] sm:$0xff] %v2719
        %2784 = vst [vmem:[%s534 + $0x88] sm:$0xff] %v2720
        %2785 = vst [vmem:[%s534 + $0x90] sm:$0xff] %v2721
        %2786 = vst [vmem:[%s534 + $0x98] sm:$0xff] %v2722
        %2787 = vst [vmem:[%s534 + $0xa0] sm:$0xff] %v2723
        %2788 = vst [vmem:[%s534 + $0xa8] sm:$0xff] %v2724
        %2789 = vst [vmem:[%s534 + $0xb0] sm:$0xff] %v2725
        %2790 = vst [vmem:[%s534 + $0xb8] sm:$0xff] %v2726
        %2791 = vst [vmem:[%s534 + $0xc0] sm:$0xff] %v2727
        %2792 = vst [vmem:[%s534 + $0xc8] sm:$0xff] %v2728
        %2793 = vst [vmem:[%s534 + $0xd0] sm:$0xff] %v2729
        %2794 = vst [vmem:[%s534 + $0xd8] sm:$0xff] %v2730
        %2795 = vst [vmem:[%s534 + $0xe0] sm:$0xff] %v2731
        %2796 = vst [vmem:[%s534 + $0xe8] sm:$0xff] %v2732
        %2797 = vst [vmem:[%s534 + $0xf0] sm:$0xff] %v2733
        %2798 = vst [vmem:[%s534 + $0xf8] sm:$0xff] %v2734
        %2799 = vst [vmem:[%s534 + $0x100] sm:$0xff] %v2735
        %2800 = vst [vmem:[%s534 + $0x108] sm:$0xff] %v2736
        %2801 = vst [vmem:[%s534 + $0x110] sm:$0xff] %v2737
        %2802 = vst [vmem:[%s534 + $0x118] sm:$0xff] %v2738
        %2803 = vst [vmem:[%s534 + $0x120] sm:$0xff] %v2739
        %2804 = vst [vmem:[%s534 + $0x128] sm:$0xff] %v2740
        %2805 = vst [vmem:[%s534 + $0x130] sm:$0xff] %v2741
        %2806 = vst [vmem:[%s534 + $0x138] sm:$0xff] %v2742
        %2807 = vst [vmem:[%s534 + $0x140] sm:$0xff] %v2743
        %2808 = vst [vmem:[%s534 + $0x148] sm:$0xff] %v2744
        %2809 = vst [vmem:[%s534 + $0x150] sm:$0xff] %v2745
        %2810 = vst [vmem:[%s534 + $0x158] sm:$0xff] %v2746
        %2811 = vst [vmem:[%s534 + $0x160] sm:$0xff] %v2747
        %2812 = vst [vmem:[%s534 + $0x168] sm:$0xff] %v2748
        %2813 = vst [vmem:[%s534 + $0x170] sm:$0xff] %v2749
        %2814 = vst [vmem:[%s534 + $0x178] sm:$0xff] %v2750
        %2815 = vst [vmem:[%s534 + $0x180] sm:$0xff] %v2751
        %2816 = vst [vmem:[%s534 + $0x188] sm:$0xff] %v2752
        %2817 = vst [vmem:[%s534 + $0x190] sm:$0xff] %v2753
        %2818 = vst [vmem:[%s534 + $0x198] sm:$0xff] %v2754
        %2819 = vst [vmem:[%s534 + $0x1a0] sm:$0xff] %v2755
        %2820 = vst [vmem:[%s534 + $0x1a8] sm:$0xff] %v2756
        %2821 = vst [vmem:[%s534 + $0x1b0] sm:$0xff] %v2757
        %2822 = vst [vmem:[%s534 + $0x1b8] sm:$0xff] %v2758
        %2823 = vst [vmem:[%s534 + $0x1c0] sm:$0xff] %v2759
        %2824 = vst [vmem:[%s534 + $0x1c8] sm:$0xff] %v2760
        %2825 = vst [vmem:[%s534 + $0x1d0] sm:$0xff] %v2761
        %2826 = vst [vmem:[%s534 + $0x1d8] sm:$0xff] %v2762
        %2827 = vst [vmem:[%s534 + $0x1e0] sm:$0xff] %v2763
        %2828 = vst [vmem:[%s534 + $0x1e8] sm:$0xff] %v2764
        %2829 = vst [vmem:[%s534 + $0x1f0] sm:$0xff] %v2765
        %2830 = vst [vmem:[%s534 + $0x1f8] sm:$0xff] %v2766
        %2831 = vst [vmem:[%s541] sm:$0xff] %v1383
        %2832 = vst [vmem:[%s541 + $0x8] sm:$0xff] %v1387
        %2833 = vst [vmem:[%s541 + $0x10] sm:$0xff] %v1393
        %2834 = vst [vmem:[%s541 + $0x18] sm:$0xff] %v1397
        %2835 = vst [vmem:[%s541 + $0x20] sm:$0xff] %v1403
        %2836 = vst [vmem:[%s541 + $0x28] sm:$0xff] %v1407
        %2837 = vst [vmem:[%s541 + $0x30] sm:$0xff] %v1413
        %2838 = vst [vmem:[%s541 + $0x38] sm:$0xff] %v1417
        %2839 = vst [vmem:[%s541 + $0x40] sm:$0xff] %v1423
        %2840 = vst [vmem:[%s541 + $0x48] sm:$0xff] %v1427
        %2841 = vst [vmem:[%s541 + $0x50] sm:$0xff] %v1433
        %2842 = vst [vmem:[%s541 + $0x58] sm:$0xff] %v1437
        %2843 = vst [vmem:[%s541 + $0x60] sm:$0xff] %v1443
        %2844 = vst [vmem:[%s541 + $0x68] sm:$0xff] %v1447
        %2845 = vst [vmem:[%s541 + $0x70] sm:$0xff] %v1453
        %2846 = vst [vmem:[%s541 + $0x78] sm:$0xff] %v1457
        %2847 = vst [vmem:[%s541 + $0x80] sm:$0xff] %v1463
        %2848 = vst [vmem:[%s541 + $0x88] sm:$0xff] %v1467
        %2849 = vst [vmem:[%s541 + $0x90] sm:$0xff] %v1473
        %2850 = vst [vmem:[%s541 + $0x98] sm:$0xff] %v1477
        %2851 = vst [vmem:[%s541 + $0xa0] sm:$0xff] %v1483
        %2852 = vst [vmem:[%s541 + $0xa8] sm:$0xff] %v1487
        %2853 = vst [vmem:[%s541 + $0xb0] sm:$0xff] %v1493
        %2854 = vst [vmem:[%s541 + $0xb8] sm:$0xff] %v1497
        %2855 = vst [vmem:[%s541 + $0xc0] sm:$0xff] %v1503
        %2856 = vst [vmem:[%s541 + $0xc8] sm:$0xff] %v1507
        %2857 = vst [vmem:[%s541 + $0xd0] sm:$0xff] %v1513
        %2858 = vst [vmem:[%s541 + $0xd8] sm:$0xff] %v1517
        %2859 = vst [vmem:[%s541 + $0xe0] sm:$0xff] %v1523
        %2860 = vst [vmem:[%s541 + $0xe8] sm:$0xff] %v1527
        %2861 = vst [vmem:[%s541 + $0xf0] sm:$0xff] %v1533
        %2862 = vst [vmem:[%s541 + $0xf8] sm:$0xff] %v1537
        %2863 = vst [vmem:[%s548] sm:$0xff] %v1385
        %2864 = vst [vmem:[%s548 + $0x8] sm:$0xff] %v1389
        %2865 = vst [vmem:[%s548 + $0x10] sm:$0xff] %v1395
        %2866 = vst [vmem:[%s548 + $0x18] sm:$0xff] %v1399
        %2867 = vst [vmem:[%s548 + $0x20] sm:$0xff] %v1405
        %2868 = vst [vmem:[%s548 + $0x28] sm:$0xff] %v1409
        %2869 = vst [vmem:[%s548 + $0x30] sm:$0xff] %v1415
        %2870 = vst [vmem:[%s548 + $0x38] sm:$0xff] %v1419
        %2871 = vst [vmem:[%s548 + $0x40] sm:$0xff] %v1425
        %2872 = vst [vmem:[%s548 + $0x48] sm:$0xff] %v1429
        %2873 = vst [vmem:[%s548 + $0x50] sm:$0xff] %v1435
        %2874 = vst [vmem:[%s548 + $0x58] sm:$0xff] %v1439
        %2875 = vst [vmem:[%s548 + $0x60] sm:$0xff] %v1445
        %2876 = vst [vmem:[%s548 + $0x68] sm:$0xff] %v1449
        %2877 = vst [vmem:[%s548 + $0x70] sm:$0xff] %v1455
        %2878 = vst [vmem:[%s548 + $0x78] sm:$0xff] %v1459
        %2879 = vst [vmem:[%s548 + $0x80] sm:$0xff] %v1465
        %2880 = vst [vmem:[%s548 + $0x88] sm:$0xff] %v1469
        %2881 = vst [vmem:[%s548 + $0x90] sm:$0xff] %v1475
        %2882 = vst [vmem:[%s548 + $0x98] sm:$0xff] %v1479
        %2883 = vst [vmem:[%s548 + $0xa0] sm:$0xff] %v1485
        %2884 = vst [vmem:[%s548 + $0xa8] sm:$0xff] %v1489
        %2885 = vst [vmem:[%s548 + $0xb0] sm:$0xff] %v1495
        %2886 = vst [vmem:[%s548 + $0xb8] sm:$0xff] %v1499
        %2887 = vst [vmem:[%s548 + $0xc0] sm:$0xff] %v1505
        %2888 = vst [vmem:[%s548 + $0xc8] sm:$0xff] %v1509
        %2889 = vst [vmem:[%s548 + $0xd0] sm:$0xff] %v1515
        %2890 = vst [vmem:[%s548 + $0xd8] sm:$0xff] %v1519
        %2891 = vst [vmem:[%s548 + $0xe0] sm:$0xff] %v1525
        %2892 = vst [vmem:[%s548 + $0xe8] sm:$0xff] %v1529
        %2893 = vst [vmem:[%s548 + $0xf0] sm:$0xff] %v1535
        %2894 = vst [vmem:[%s548 + $0xf8] sm:$0xff] %v1539
        %s2895 = sand.u32 %s266, 1
        %s2896 = scalar_lea.sflag [#allocation4], %s2895
        %s2897 = sand.u32 %s266, 1
        %s2898 = smul.addr %s2897, 512
        %s2899 = scalar_lea.vmem [#allocation13], %s2898
        %s2900 = sand.u32 %s38, 1
        %s2901 = scalar_lea.sflag [#allocation15], %s2900
        %s2902 = sand.u32 %s292, 1
        %s2903 = smul.addr %s2902, 256
        %s2904 = scalar_lea.vmem [#allocation14], %s2903
        %s2905 = sand.u32 %s38, 1
        %s2906 = scalar_lea.sflag [#allocation15], %s2905
        %s2907 = sand.u32 %s318, 1
        %s2908 = smul.addr %s2907, 256
        %s2909 = scalar_lea.vmem [#allocation16], %s2908
        // Predicated region
        $region85: #{tpu_custom_call.1} parent=59 // pred_check
          %p2910 = pneg %p276
        $region86: #{tpu_custom_call.1} parent=59 // pred_check_branch
          %2912 = sbr.rel (%p2910) target = $region88
        $region87: #{tpu_custom_call.1} parent=59 // pred_region
          %s2913 = smul.u32 32, %s38
          %s2915 = ssub.s32 8192, 8192
          %2916 = vsyncadd %s2896, %s2915
          %s2917 = smul.addr %s2913, 2
          %s2918 = smul.addr %s2917, 128
          %s2919 = scalar_lea.hbm %s10, %s2918
          %s2920 = sshll.u32 %s2899, 4
          %s2921 = int_to_ptr.vmem [resolvable:$true] %s2920
          %2926 = dma.vmem_to_hbm [thread:$0]  %s2921, 8192, %s2919, %s2896, 256, 256, 16
        $region88: #{tpu_custom_call.1} parent=59 // pred_fallthru
          _
        // Predicated region
        $region89: #{tpu_custom_call.1} parent=59 // pred_check
          %p2927 = pneg %p302
        $region90: #{tpu_custom_call.1} parent=59 // pred_check_branch
          %2929 = sbr.rel (%p2927) target = $region92
        $region91: #{tpu_custom_call.1} parent=59 // pred_region
          %s2930 = smul.u32 32, %s38
          %s2932 = ssub.s32 4096, 4096
          %2933 = vsyncadd %s2901, %s2932
          %s2934 = smul.addr %s2930, 128
          %s2935 = scalar_lea.hbm %s11, %s2934
          %s2936 = sshll.u32 %s2904, 4
          %s2937 = int_to_ptr.vmem [resolvable:$true] %s2936
          %2942 = dma.vmem_to_hbm [thread:$0]  %s2937, 4096, %s2935, %s2901, 128, 128, 8
        $region92: #{tpu_custom_call.1} parent=59 // pred_fallthru
          _
        // Predicated region
        $region93: #{tpu_custom_call.1} parent=59 // pred_check
          %p2943 = pneg %p328
        $region94: #{tpu_custom_call.1} parent=59 // pred_check_branch
          %2945 = sbr.rel (%p2943) target = $region96
        $region95: #{tpu_custom_call.1} parent=59 // pred_region
          %s2946 = smul.u32 32, %s38
          %s2948 = ssub.s32 4096, 4096
          %2949 = vsyncadd %s2906, %s2948
          %s2950 = smul.addr %s2946, 128
          %s2951 = scalar_lea.hbm %s12, %s2950
          %s2952 = sshll.u32 %s2909, 4
          %s2953 = int_to_ptr.vmem [resolvable:$true] %s2952
          %2958 = dma.vmem_to_hbm [thread:$0]  %s2953, 4096, %s2951, %s2906, 128, 128, 8
        $region96: #{tpu_custom_call.1} parent=59 // pred_fallthru
          _
      $region60: #{tpu_custom_call.1} parent=5 // pred_fallthru
        _
      %p2959 = scmp.le.s32.totalorder 2, %s33
      // Predicated region
      $region97: #{tpu_custom_call.1} parent=5 // pred_check
        %p2960 = pneg %p2959
      $region98: #{tpu_custom_call.1} parent=5 // pred_check_branch
        %2962 = sbr.rel (%p2960) target = $region100
      $region99: #{tpu_custom_call.1} parent=5 // pred_region
        %s2963 = ssub.s32 %s33, 2
        // Predicated region
        $region101: #{tpu_custom_call.1} parent=99 // pred_check
          %p2964 = pneg %p282
        $region102: #{tpu_custom_call.1} parent=99 // pred_check_branch
          %2966 = sbr.rel (%p2964) target = $region104
        $region103: #{tpu_custom_call.1} parent=99 // pred_region
          %s2967 = sand.u32 %s267, 1
          %s2968 = scalar_lea.sflag [#allocation4], %s2967
          %s2969 = sand.u32 %s267, 1
          %s2970 = smul.addr %s2969, 512
          %s2971 = scalar_lea.vmem [#allocation13], %s2970
          %2972 = dma.done %s2968, 8192
        $region104: #{tpu_custom_call.1} parent=99 // pred_fallthru
          _
        // Predicated region
        $region105: #{tpu_custom_call.1} parent=99 // pred_check
          %p2973 = pneg %p308
        $region106: #{tpu_custom_call.1} parent=99 // pred_check_branch
          %2975 = sbr.rel (%p2973) target = $region108
        $region107: #{tpu_custom_call.1} parent=99 // pred_region
          %s2976 = sand.u32 %s39, 1
          %s2977 = scalar_lea.sflag [#allocation15], %s2976
          %s2978 = sand.u32 %s293, 1
          %s2979 = smul.addr %s2978, 256
          %s2980 = scalar_lea.vmem [#allocation14], %s2979
          %2981 = dma.done %s2977, 4096
        $region108: #{tpu_custom_call.1} parent=99 // pred_fallthru
          _
        // Predicated region
        $region109: #{tpu_custom_call.1} parent=99 // pred_check
          %p2982 = pneg %p334
        $region110: #{tpu_custom_call.1} parent=99 // pred_check_branch
          %2984 = sbr.rel (%p2982) target = $region112
        $region111: #{tpu_custom_call.1} parent=99 // pred_region
          %s2985 = sand.u32 %s39, 1
          %s2986 = scalar_lea.sflag [#allocation15], %s2985
          %s2987 = sand.u32 %s319, 1
          %s2988 = smul.addr %s2987, 256
          %s2989 = scalar_lea.vmem [#allocation16], %s2988
          %2990 = dma.done %s2986, 4096
        $region112: #{tpu_custom_call.1} parent=99 // pred_fallthru
          _
      $region100: #{tpu_custom_call.1} parent=5 // pred_fallthru
        _
    $region6: #{tpu_custom_call.1} parent=1 // loop_footer
      %s37 = sadd.s32 1, %s33
    $region7: #{tpu_custom_call.1} parent=1 // loop_footer_branch
      %32 = sbr.rel target = $region3
    $region8: #{tpu_custom_call.1} parent=1 // loop_exit
      _
    %2991 = vsyncpa [#allocation3], 1
    %s2992 = scalar_lea.sflag [#allocation3], 1
    %2993 = vsyncpa %s2992, 1
    %2994 = vsyncpa [#allocation6], 1
    %s2995 = scalar_lea.sflag [#allocation6], 1
    %2996 = vsyncpa %s2995, 1
    %2997 = vsyncpa [#allocation9], 1
    %2998 = vsyncpa [#allocation12], 1
    %2999 = vsyncpa [#allocation4], 1
    %s3000 = scalar_lea.sflag [#allocation4], 1
    %3001 = vsyncpa %s3000, 1
    %3002 = vsyncpa [#allocation15], 1
    %s3003 = scalar_lea.sflag [#allocation15], 1
    %3004 = vsyncpa %s3003, 1

</llo_original>
